<compile_context>
chip_gen: v7x
topology: tpu7x:2x2x1
jax: 0.10.0
libtpu: 0.0.40
codegen_flags: <defaults>
</compile_context>

<pallas_src>
import jax
import jax.numpy as jnp
from jax.experimental import pallas as pl
from jax.experimental.pallas import tpu as pltpu

# Feature vocab sizes from the module __init__:
#   Sex 2, Pclass 4, Age 81, SibSp 9, Parch 10, Embarked 4, Fare 53
VOCAB_SIZES = (2, 4, 81, 9, 10, 4, 53)
# Group A: first six features packed contiguously (rows 0..109) + bias row 110.
OFFSETS_A = (0, 2, 6, 87, 96, 106)
BIAS_ROW = 110                      # "always-on" ones-carrier row in group A
GROUP = 128                         # lane width of each vocab group
IDX_COLS = 8                        # 6 group-A indices + fare (group-B local) + pad


def _round_up(x, m):
    return (x + m - 1) // m * m


def _choose_tiling(b):
    """Batch tile size: big enough to amortize grid-step overhead & fill the MXU,
    small enough to keep >=2 grid steps (both v7x TensorCores) for moderate b."""
    if b <= 256:
        tile = 128
    elif b <= 1024:
        tile = 256
    else:
        tile = 512
    return tile, _round_up(b, tile)


def titanic_kernel(idx_ref, table_ref, w1_ref, w2_ref, w3t_ref, out_ref):
    """One batch tile: split-group multi-hot gather-matmul + 3x (Linear -> ReLU)."""
    idx = idx_ref[...]                                          # (TM, 8) int32
    col = jax.lax.broadcasted_iota(jnp.int32, (1, GROUP), 1)    # (1, 128) lane ids

    # Group A multi-hot: 6 feature compares + one constant compare for the bias row.
    hit_a = col == idx[:, 0:1]
    for f in range(1, 6):
        hit_a = jnp.logical_or(hit_a, col == idx[:, f:f + 1])
    hit_a = jnp.logical_or(hit_a, col == BIAS_ROW)
    mh_a = hit_a.astype(table_ref.dtype)                        # (TM, 128) bf16

    # Group B multi-hot: fare only (index is already group-B local).
    mh_b = (col == idx[:, 6:7]).astype(table_ref.dtype)         # (TM, 128) bf16

    # Embedding lookup + sum of all 7 embeddings == two MXU matmuls.
    vec = jnp.dot(mh_a, table_ref[:GROUP, :], preferred_element_type=jnp.float32)
    vec = vec + jnp.dot(mh_b, table_ref[GROUP:, :], preferred_element_type=jnp.float32)

    # fc1 / fc2 with folded biases (ones-carrier column), ReLU after each.
    x = jnp.dot(vec.astype(w1_ref.dtype), w1_ref[...], preferred_element_type=jnp.float32)
    x = jnp.maximum(x, 0.0)
    x = jnp.dot(x.astype(w2_ref.dtype), w2_ref[...], preferred_element_type=jnp.float32)
    x = jnp.maximum(x, 0.0)

    # fc3 computed transposed: out_t = W3t @ x^T -> (8, TM); lane-dense writeback.
    out_t = jax.lax.dot_general(
        w3t_ref[...], x.astype(w3t_ref.dtype),
        dimension_numbers=(((1,), (1,)), ((), ())),
        preferred_element_type=jnp.float32)
    out_ref[...] = jnp.maximum(out_t, 0.0)                      # module applies ReLU on fc3 too


def prepare_kernel_params(params, embedding_dim, d1, d2, dtype=jnp.bfloat16):
    """Pack the 7 tables into one (2*GROUP, E_PAD) table (two 128-row groups) and
    fold biases into lane-padded weights via a ones-carrier column."""
    e_pad = _round_up(embedding_dim + 1, 128)
    d1_pad = _round_up(d1 + 1, 128)
    d2_pad = _round_up(d2 + 1, 128)
    one_e, one_d1, one_d2 = embedding_dim, d1, d2

    table = jnp.zeros((2 * GROUP, e_pad), jnp.float32)
    group_a_keys = ("sex_emb", "pclass_emb", "age_emb", "sibsp_emb",
                    "parch_emb", "embarked_emb")
    for key, off, vocab in zip(group_a_keys, OFFSETS_A, VOCAB_SIZES[:6]):
        table = table.at[off:off + vocab, :embedding_dim].set(params[key])
    table = table.at[BIAS_ROW, one_e].set(1.0)                  # ones carrier for group A
    table = table.at[GROUP:GROUP + VOCAB_SIZES[6], :embedding_dim].set(params["fare_emb"])

    w1 = jnp.zeros((e_pad, d1_pad), jnp.float32)
    w1 = w1.at[:embedding_dim, :d1].set(params["w1"])
    w1 = w1.at[one_e, :d1].set(params["b1"].reshape(-1))        # bias row
    w1 = w1.at[one_e, one_d1].set(1.0)                          # propagate the 1

    w2 = jnp.zeros((d1_pad, d2_pad), jnp.float32)
    w2 = w2.at[:d1, :d2].set(params["w2"])
    w2 = w2.at[one_d1, :d2].set(params["b2"].reshape(-1))
    w2 = w2.at[one_d1, one_d2].set(1.0)

    # fc3 stored transposed: (8, d2_pad); rows 0..1 are the two output neurons.
    w3t = jnp.zeros((8, d2_pad), jnp.float32)
    w3t = w3t.at[:2, :d2].set(params["w3"].T)
    w3t = w3t.at[:2, one_d2].set(params["b3"].reshape(-1))

    return {"table": table.astype(dtype), "w1": w1.astype(dtype),
            "w2": w2.astype(dtype), "w3t": w3t.astype(dtype)}


@jax.jit
def titanic_forward(kparams, sex, pclass, age, sibsp, parch, embarked, fare):
    feats_a = (sex, pclass, age, sibsp, parch, embarked)
    b = sex.shape[0]
    cols = [f.astype(jnp.int32) + off for f, off in zip(feats_a, OFFSETS_A)]
    cols.append(fare.astype(jnp.int32))                         # group-B local index
    cols.append(jnp.zeros((b,), jnp.int32))                     # unused pad column
    idx = jnp.stack(cols, axis=1)                               # (B, 8) int32

    tile_m, b_pad = _choose_tiling(b)
    if b_pad != b:
        idx = jnp.pad(idx, ((0, b_pad - b), (0, 0)))            # padded rows discarded later

    table, w1, w2, w3t = kparams["table"], kparams["w1"], kparams["w2"], kparams["w3t"]
    e_pad = table.shape[1]
    d1_pad = w1.shape[1]
    d2_pad = w2.shape[1]
    grid = (b_pad // tile_m,)

    flops = 2 * b_pad * (2 * GROUP * e_pad + e_pad * d1_pad + d1_pad * d2_pad + d2_pad * 8)
    bytes_accessed = (idx.size * 4
                      + 2 * (table.size + w1.size + w2.size + w3t.size)
                      + 8 * b_pad * 4)

    out_t = pl.pallas_call(
        titanic_kernel,
        out_shape=jax.ShapeDtypeStruct((8, b_pad), jnp.float32),
        grid_spec=pltpu.PrefetchScalarGridSpec(
            num_scalar_prefetch=0,
            grid=grid,
            in_specs=[
                pl.BlockSpec((tile_m, IDX_COLS), lambda i: (i, 0)),
                pl.BlockSpec(table.shape, lambda i: (0, 0)),
                pl.BlockSpec(w1.shape, lambda i: (0, 0)),
                pl.BlockSpec(w2.shape, lambda i: (0, 0)),
                pl.BlockSpec(w3t.shape, lambda i: (0, 0)),
            ],
            out_specs=pl.BlockSpec((8, tile_m), lambda i: (0, i)),
        ),
        compiler_params=pltpu.CompilerParams(
            dimension_semantics=("parallel",)),
        cost_estimate=pl.CostEstimate(
            flops=flops, transcendentals=0, bytes_accessed=bytes_accessed),
    )(idx, table, w1, w2, w3t)

    return out_t[:2, :b].T                                      # (B, 2)


def make_params(key, embedding_dim, linear_dim_1, linear_dim_2):
    ks = jax.random.split(key, 13)
    scale = 0.1

    def rn(k, shape):
        return (scale * jax.random.normal(k, shape)).astype(jnp.float32)

    return {
        "sex_emb":      rn(ks[0],  (2,  embedding_dim)),
        "pclass_emb":   rn(ks[1],  (4,  embedding_dim)),
        "age_emb":      rn(ks[2],  (81, embedding_dim)),
        "sibsp_emb":    rn(ks[3],  (9,  embedding_dim)),
        "parch_emb":    rn(ks[4],  (10, embedding_dim)),
        "embarked_emb": rn(ks[5],  (4,  embedding_dim)),
        "fare_emb":     rn(ks[6],  (53, embedding_dim)),
        "w1": rn(ks[7],  (embedding_dim, linear_dim_1)),
        "b1": rn(ks[8],  (1, linear_dim_1)),
        "w2": rn(ks[9],  (linear_dim_1, linear_dim_2)),
        "b2": rn(ks[10], (1, linear_dim_2)),
        "w3": rn(ks[11], (linear_dim_2, 2)),
        "b3": rn(ks[12], (1, 2)),
    }


def reference_forward(params, sex, pclass, age, sibsp, parch, embarked, fare):
    """Pure-JAX reference mirroring the PyTorch forward."""
    v = (params["sex_emb"][sex] + params["pclass_emb"][pclass]
         + params["age_emb"][age] + params["sibsp_emb"][sibsp]
         + params["parch_emb"][parch] + params["embarked_emb"][embarked]
         + params["fare_emb"][fare])
    x = jnp.maximum(v @ params["w1"] + params["b1"], 0.0)
    x = jnp.maximum(x @ params["w2"] + params["b2"], 0.0)
    x = jnp.maximum(x @ params["w3"] + params["b3"], 0.0)
    return x


if __name__ == "__main__":
    embedding_dim, linear_dim_1, linear_dim_2 = 32, 64, 32
    B = 200   # non-multiple of the tile size to exercise the batch-padding path

    key = jax.random.PRNGKey(0)
    pkey, ikey = jax.random.split(key)
    params = make_params(pkey, embedding_dim, linear_dim_1, linear_dim_2)
    kparams = prepare_kernel_params(params, embedding_dim, linear_dim_1, linear_dim_2)

    iks = jax.random.split(ikey, 7)
    sex      = jax.random.randint(iks[0], (B,), 0, 2,  dtype=jnp.int32)
    pclass   = jax.random.randint(iks[1], (B,), 0, 4,  dtype=jnp.int32)
    age      = jax.random.randint(iks[2], (B,), 0, 81, dtype=jnp.int32)
    sibsp    = jax.random.randint(iks[3], (B,), 0, 9,  dtype=jnp.int32)
    parch    = jax.random.randint(iks[4], (B,), 0, 10, dtype=jnp.int32)
    embarked = jax.random.randint(iks[5], (B,), 0, 4,  dtype=jnp.int32)
    fare     = jax.random.randint(iks[6], (B,), 0, 53, dtype=jnp.int32)

    out = titanic_forward(kparams, sex, pclass, age, sibsp, parch, embarked, fare)
    out = jax.block_until_ready(out)

    # Reference uses the same bf16-quantized weights (what the kernel actually holds),
    # evaluated in f32; remaining deltas are bf16 activation casts between layers.
    params_q = jax.tree_util.tree_map(
        lambda a: a.astype(jnp.bfloat16).astype(jnp.float32), params)
    ref = reference_forward(params_q, sex, pclass, age, sibsp, parch, embarked, fare)

    assert out.shape == (B, 2), out.shape
    assert jnp.allclose(out, ref, atol=1e-2, rtol=1e-2), (
        "mismatch vs reference; max abs diff = "
        f"{float(jnp.max(jnp.abs(out - ref)))}")

    print("KERNEL_OK")
</pallas_src>

<mosaic_0001>
module attributes {stable_mosaic.version = 11 : i64} {
  func.func @titanic_kernel(%arg0: i32, %arg1: memref<128x8xi32, #tpu.memory_space<vmem>>, %arg2: memref<256x128xbf16, #tpu.memory_space<vmem>>, %arg3: memref<128x128xbf16, #tpu.memory_space<vmem>>, %arg4: memref<128x128xbf16, #tpu.memory_space<vmem>>, %arg5: memref<8x128xbf16, #tpu.memory_space<vmem>>, %arg6: memref<8x128xf32, #tpu.memory_space<vmem>>) attributes {dimension_semantics = [#tpu.dimension_semantics<parallel>], iteration_bounds = array<i64: 2>, scalar_prefetch = 0 : i64, scratch_operands = 0 : i64, tpu.core_type = #tpu.core_type<tc>, window_params = [{transform_indices = @transform_0, window_bounds = array<i64: 128, 8>}, {pipeline_mode = #tpu.pipeline_mode<synchronous>, transform_indices = @transform_1, window_bounds = array<i64: 256, 128>}, {pipeline_mode = #tpu.pipeline_mode<synchronous>, transform_indices = @transform_2, window_bounds = array<i64: 128, 128>}, {pipeline_mode = #tpu.pipeline_mode<synchronous>, transform_indices = @transform_3, window_bounds = array<i64: 128, 128>}, {pipeline_mode = #tpu.pipeline_mode<synchronous>, transform_indices = @transform_4, window_bounds = array<i64: 8, 128>}, {transform_indices = @transform_5, window_bounds = array<i64: 8, 128>}]} {
    %c0 = arith.constant 0 : index
    %c0_0 = arith.constant 0 : index
    %0 = vector.load %arg1[%c0, %c0_0] : memref<128x8xi32, #tpu.memory_space<vmem>>, vector<128x8xi32>
    %1 = tpu.iota {dimensions = array<i32: 1>} : vector<1x128xi32>
    %2 = vector.extract_strided_slice %0 {offsets = [0, 0], sizes = [128, 1], strides = [1, 1]} : vector<128x8xi32> to vector<128x1xi32>
    %3 = vector.broadcast %1 : vector<1x128xi32> to vector<128x128xi32>
    %4 = vector.broadcast %2 : vector<128x1xi32> to vector<128x128xi32>
    %5 = arith.cmpi eq, %3, %4 : vector<128x128xi32>
    %6 = vector.extract_strided_slice %0 {offsets = [0, 1], sizes = [128, 1], strides = [1, 1]} : vector<128x8xi32> to vector<128x1xi32>
    %7 = vector.broadcast %1 : vector<1x128xi32> to vector<128x128xi32>
    %8 = vector.broadcast %6 : vector<128x1xi32> to vector<128x128xi32>
    %9 = arith.cmpi eq, %7, %8 : vector<128x128xi32>
    %10 = arith.ori %5, %9 : vector<128x128xi1>
    %11 = vector.extract_strided_slice %0 {offsets = [0, 2], sizes = [128, 1], strides = [1, 1]} : vector<128x8xi32> to vector<128x1xi32>
    %12 = vector.broadcast %1 : vector<1x128xi32> to vector<128x128xi32>
    %13 = vector.broadcast %11 : vector<128x1xi32> to vector<128x128xi32>
    %14 = arith.cmpi eq, %12, %13 : vector<128x128xi32>
    %15 = arith.ori %10, %14 : vector<128x128xi1>
    %16 = vector.extract_strided_slice %0 {offsets = [0, 3], sizes = [128, 1], strides = [1, 1]} : vector<128x8xi32> to vector<128x1xi32>
    %17 = vector.broadcast %1 : vector<1x128xi32> to vector<128x128xi32>
    %18 = vector.broadcast %16 : vector<128x1xi32> to vector<128x128xi32>
    %19 = arith.cmpi eq, %17, %18 : vector<128x128xi32>
    %20 = arith.ori %15, %19 : vector<128x128xi1>
    %21 = vector.extract_strided_slice %0 {offsets = [0, 4], sizes = [128, 1], strides = [1, 1]} : vector<128x8xi32> to vector<128x1xi32>
    %22 = vector.broadcast %1 : vector<1x128xi32> to vector<128x128xi32>
    %23 = vector.broadcast %21 : vector<128x1xi32> to vector<128x128xi32>
    %24 = arith.cmpi eq, %22, %23 : vector<128x128xi32>
    %25 = arith.ori %20, %24 : vector<128x128xi1>
    %26 = vector.extract_strided_slice %0 {offsets = [0, 5], sizes = [128, 1], strides = [1, 1]} : vector<128x8xi32> to vector<128x1xi32>
    %27 = vector.broadcast %1 : vector<1x128xi32> to vector<128x128xi32>
    %28 = vector.broadcast %26 : vector<128x1xi32> to vector<128x128xi32>
    %29 = arith.cmpi eq, %27, %28 : vector<128x128xi32>
    %30 = arith.ori %25, %29 : vector<128x128xi1>
    %c110_i32 = arith.constant 110 : i32
    %31 = vector.broadcast %c110_i32 : i32 to vector<1x128xi32>
    %32 = arith.cmpi eq, %1, %31 : vector<1x128xi32>
    %33 = vector.broadcast %32 : vector<1x128xi1> to vector<128x128xi1>
    %34 = arith.ori %30, %33 : vector<128x128xi1>
    %35 = arith.extui %34 : vector<128x128xi1> to vector<128x128xi32>
    %36 = arith.sitofp %35 : vector<128x128xi32> to vector<128x128xf32>
    %37 = arith.truncf %36 : vector<128x128xf32> to vector<128x128xbf16>
    %38 = vector.extract_strided_slice %0 {offsets = [0, 6], sizes = [128, 1], strides = [1, 1]} : vector<128x8xi32> to vector<128x1xi32>
    %39 = vector.broadcast %1 : vector<1x128xi32> to vector<128x128xi32>
    %40 = vector.broadcast %38 : vector<128x1xi32> to vector<128x128xi32>
    %41 = arith.cmpi eq, %39, %40 : vector<128x128xi32>
    %42 = arith.extui %41 : vector<128x128xi1> to vector<128x128xi32>
    %43 = arith.sitofp %42 : vector<128x128xi32> to vector<128x128xf32>
    %44 = arith.truncf %43 : vector<128x128xf32> to vector<128x128xbf16>
    %c0_1 = arith.constant 0 : index
    %c0_2 = arith.constant 0 : index
    %45 = vector.load %arg2[%c0_1, %c0_2] : memref<256x128xbf16, #tpu.memory_space<vmem>>, vector<128x128xbf16>
    %cst = arith.constant dense<0.000000e+00> : vector<128x128xf32>
    %46 = tpu.matmul %37, %45, %cst {dimension_numbers = #tpu.dot_dimension_numbers<[1], [0], [0], [1], [0, 0, 1, 1], [], []>} : vector<128x128xbf16>, vector<128x128xbf16>, vector<128x128xf32> -> vector<128x128xf32>
    %c128 = arith.constant 128 : index
    %c0_3 = arith.constant 0 : index
    %47 = vector.load %arg2[%c128, %c0_3] : memref<256x128xbf16, #tpu.memory_space<vmem>>, vector<128x128xbf16>
    %cst_4 = arith.constant dense<0.000000e+00> : vector<128x128xf32>
    %48 = tpu.matmul %44, %47, %cst_4 {dimension_numbers = #tpu.dot_dimension_numbers<[1], [0], [0], [1], [0, 0, 1, 1], [], []>} : vector<128x128xbf16>, vector<128x128xbf16>, vector<128x128xf32> -> vector<128x128xf32>
    %49 = arith.addf %46, %48 : vector<128x128xf32>
    %50 = arith.truncf %49 : vector<128x128xf32> to vector<128x128xbf16>
    %c0_5 = arith.constant 0 : index
    %c0_6 = arith.constant 0 : index
    %51 = vector.load %arg3[%c0_5, %c0_6] : memref<128x128xbf16, #tpu.memory_space<vmem>>, vector<128x128xbf16>
    %cst_7 = arith.constant dense<0.000000e+00> : vector<128x128xf32>
    %52 = tpu.matmul %50, %51, %cst_7 {dimension_numbers = #tpu.dot_dimension_numbers<[1], [0], [0], [1], [0, 0, 1, 1], [], []>} : vector<128x128xbf16>, vector<128x128xbf16>, vector<128x128xf32> -> vector<128x128xf32>
    %cst_8 = arith.constant 0.000000e+00 : f32
    %53 = vector.broadcast %cst_8 : f32 to vector<128x128xf32>
    %54 = arith.maximumf %52, %53 : vector<128x128xf32>
    %55 = arith.truncf %54 : vector<128x128xf32> to vector<128x128xbf16>
    %c0_9 = arith.constant 0 : index
    %c0_10 = arith.constant 0 : index
    %56 = vector.load %arg4[%c0_9, %c0_10] : memref<128x128xbf16, #tpu.memory_space<vmem>>, vector<128x128xbf16>
    %cst_11 = arith.constant dense<0.000000e+00> : vector<128x128xf32>
    %57 = tpu.matmul %55, %56, %cst_11 {dimension_numbers = #tpu.dot_dimension_numbers<[1], [0], [0], [1], [0, 0, 1, 1], [], []>} : vector<128x128xbf16>, vector<128x128xbf16>, vector<128x128xf32> -> vector<128x128xf32>
    %cst_12 = arith.constant 0.000000e+00 : f32
    %58 = vector.broadcast %cst_12 : f32 to vector<128x128xf32>
    %59 = arith.maximumf %57, %58 : vector<128x128xf32>
    %c0_13 = arith.constant 0 : index
    %c0_14 = arith.constant 0 : index
    %60 = vector.load %arg5[%c0_13, %c0_14] : memref<8x128xbf16, #tpu.memory_space<vmem>>, vector<8x128xbf16>
    %61 = arith.truncf %59 : vector<128x128xf32> to vector<128x128xbf16>
    %cst_15 = arith.constant dense<0.000000e+00> : vector<8x128xf32>
    %62 = tpu.matmul %60, %61, %cst_15 {dimension_numbers = #tpu.dot_dimension_numbers<[1], [1], [0], [0], [0, 0, 1, 0], [], []>} : vector<8x128xbf16>, vector<128x128xbf16>, vector<8x128xf32> -> vector<8x128xf32>
    %cst_16 = arith.constant 0.000000e+00 : f32
    %63 = vector.broadcast %cst_16 : f32 to vector<8x128xf32>
    %64 = arith.maximumf %62, %63 : vector<8x128xf32>
    %c0_17 = arith.constant 0 : index
    %c0_18 = arith.constant 0 : index
    %65 = vector.load %arg6[%c0_17, %c0_18] : memref<8x128xf32, #tpu.memory_space<vmem>>, vector<8x128xf32>
    tpu.vector_store %arg6[%c0_17, %c0_18], %64 {strides = array<i32>} : memref<8x128xf32, #tpu.memory_space<vmem>>, vector<8x128xf32>,
    return
  }
  func.func @transform_0(%arg0: i32) -> (i32, i32) {
    %c0_i32 = arith.constant 0 : i32
    %c0_i32_0 = arith.constant 0 : i32
    return %arg0, %c0_i32 : i32, i32
  }
  func.func @transform_1(%arg0: i32) -> (i32, i32) {
    %c0_i32 = arith.constant 0 : i32
    %c0_i32_0 = arith.constant 0 : i32
    %c0_i32_1 = arith.constant 0 : i32
    return %c0_i32, %c0_i32_0 : i32, i32
  }
  func.func @transform_2(%arg0: i32) -> (i32, i32) {
    %c0_i32 = arith.constant 0 : i32
    %c0_i32_0 = arith.constant 0 : i32
    %c0_i32_1 = arith.constant 0 : i32
    return %c0_i32, %c0_i32_0 : i32, i32
  }
  func.func @transform_3(%arg0: i32) -> (i32, i32) {
    %c0_i32 = arith.constant 0 : i32
    %c0_i32_0 = arith.constant 0 : i32
    %c0_i32_1 = arith.constant 0 : i32
    return %c0_i32, %c0_i32_0 : i32, i32
  }
  func.func @transform_4(%arg0: i32) -> (i32, i32) {
    %c0_i32 = arith.constant 0 : i32
    %c0_i32_0 = arith.constant 0 : i32
    %c0_i32_1 = arith.constant 0 : i32
    return %c0_i32, %c0_i32_0 : i32, i32
  }
  func.func @transform_5(%arg0: i32) -> (i32, i32) {
    %c0_i32 = arith.constant 0 : i32
    %c0_i32_0 = arith.constant 0 : i32
    return %c0_i32, %arg0 : i32, i32
  }
}

</mosaic_0001>

<llo_original>
// kernel: titanic_forward.1
$region0: #{titanic_forward.1}
  #allocation0 [shape = 'u32[]', space=smem, size = 0x4, offset = 0x4, fixed_abs, tag = 'smem constant byte address 0x4 - core index']
  #allocation1 [shape = 'u32[144,128]{1,0:T(1,128)}', space=vmem, size = 0x12000, scoped, tag = 'internal scratch']
  %s0 = inlined_call_operand.vmem [shape: s32[256,8], index: 0, kind: input, shape index: {}]
  %s1 = inlined_call_operand.vmem [shape: bf16[256,128], index: 1, kind: input, shape index: {}]
  %s2 = inlined_call_operand.vmem [shape: bf16[128,128], index: 2, kind: input, shape index: {}]
  %s3 = inlined_call_operand.vmem [shape: bf16[128,128], index: 3, kind: input, shape index: {}]
  %s4 = inlined_call_operand.vmem [shape: bf16[8,128], index: 4, kind: input, shape index: {}]
  %s5 = inlined_call_operand.vmem [shape: f32[8,256], index: 5, kind: output, shape index: {}]
  %s6 = sld [smem:[#allocation0]]
  $region53: #{titanic_forward.1} parent=0
    _
  %s8 = ssub.s32 1, %s6
  %s9 = scalar_select 0, %s8, %s6
  loop: start=0, step=1, limit=4
  $region2: #{titanic_forward.1} parent=0 // loop_pre_header
    _
  $region3: #{titanic_forward.1} parent=0 // loop_header
    %s11 = sphi 0, %s15
    %p12 = scmp.ge.s32.totalorder %s11, 4
    %s21 = sphi 0, %s23
    %s24 = sphi 0, %s21
    %s25 = sphi 0, %s24
    %s41 = sphi 0, %s25
    %s45 = sphi 0, %s45
    %s47 = sphi 0, %s45
    %s48 = sphi 0, %s47
    %s62 = sphi 0, %s48
    %s66 = sphi 0, %s66
    %s68 = sphi 0, %s66
    %s69 = sphi 0, %s68
    %s83 = sphi 0, %s69
    %s87 = sphi 0, %s87
    %s89 = sphi 0, %s87
    %s90 = sphi 0, %s89
    %s104 = sphi 0, %s90
    %s108 = sphi 0, %s108
    %s110 = sphi 0, %s108
    %s111 = sphi 0, %s110
    %s125 = sphi 0, %s111
    %s131 = sphi 0, %s133
    %s134 = sphi 0, %s131
    %s135 = sphi 0, %s134
    %s151 = sphi 0, %s135
  $region4: #{titanic_forward.1} parent=0 // loop_header_branch
    %14 = sbr.rel (%p12) target = $region8
  $region5: #{titanic_forward.1} parent=0 // loop_body
    %s16 = ssub.s32 %s11, 1
    %s17 = ssub.s32 %s11, 2
    %s18 = sadd.s32 %s11, 1
    %s19 = ssub.s32 %s11, %s18
    %p20 = scmp.eq.s32.totalorder %s19, 0
    %s22 = sadd.s32 %s21, 1
    %s23 = scalar_select %p20, %s21, %s22
    %p26 = pneg %p20
    %p27 = scmp.eq.s32.totalorder %s11, 1
    %p28 = por %p26, %p27
    %p29 = scmp.ne.s32.totalorder %s21, %s24
    %p30 = scmp.eq.s32.totalorder %s11, 0
    %p31 = por %p29, %p30
    %p32 = scmp.ne.s32.totalorder %s21, %s24
    %p33 = scmp.eq.s32.totalorder %s16, 1
    %p34 = por %p32, %p33
    %p35 = scmp.ne.s32.totalorder %s24, %s25
    %p36 = scmp.eq.s32.totalorder %s16, 0
    %p37 = por %p35, %p36
    %p38 = scmp.ne.s32.totalorder %s24, %s25
    %p39 = scmp.eq.s32.totalorder %s17, 1
    %p40 = por %p38, %p39
    %p42 = scmp.ne.s32.totalorder %s25, %s41
    %p43 = scmp.eq.s32.totalorder %s17, 0
    %p44 = por %p42, %p43
    %s46 = sadd.s32 %s45, 1
    %p49 = scmp.eq.s32.totalorder %s11, 1
    %p50 = scmp.ne.s32.totalorder %s45, %s47
    %p51 = scmp.eq.s32.totalorder %s11, 0
    %p52 = por %p50, %p51
    %p53 = scmp.ne.s32.totalorder %s45, %s47
    %p54 = scmp.eq.s32.totalorder %s16, 1
    %p55 = por %p53, %p54
    %p56 = scmp.ne.s32.totalorder %s47, %s48
    %p57 = scmp.eq.s32.totalorder %s16, 0
    %p58 = por %p56, %p57
    %p59 = scmp.ne.s32.totalorder %s47, %s48
    %p60 = scmp.eq.s32.totalorder %s17, 1
    %p61 = por %p59, %p60
    %p63 = scmp.ne.s32.totalorder %s48, %s62
    %p64 = scmp.eq.s32.totalorder %s17, 0
    %p65 = por %p63, %p64
    %s67 = sadd.s32 %s66, 1
    %p70 = scmp.eq.s32.totalorder %s11, 1
    %p71 = scmp.ne.s32.totalorder %s66, %s68
    %p72 = scmp.eq.s32.totalorder %s11, 0
    %p73 = por %p71, %p72
    %p74 = scmp.ne.s32.totalorder %s66, %s68
    %p75 = scmp.eq.s32.totalorder %s16, 1
    %p76 = por %p74, %p75
    %p77 = scmp.ne.s32.totalorder %s68, %s69
    %p78 = scmp.eq.s32.totalorder %s16, 0
    %p79 = por %p77, %p78
    %p80 = scmp.ne.s32.totalorder %s68, %s69
    %p81 = scmp.eq.s32.totalorder %s17, 1
    %p82 = por %p80, %p81
    %p84 = scmp.ne.s32.totalorder %s69, %s83
    %p85 = scmp.eq.s32.totalorder %s17, 0
    %p86 = por %p84, %p85
    %s88 = sadd.s32 %s87, 1
    %p91 = scmp.eq.s32.totalorder %s11, 1
    %p92 = scmp.ne.s32.totalorder %s87, %s89
    %p93 = scmp.eq.s32.totalorder %s11, 0
    %p94 = por %p92, %p93
    %p95 = scmp.ne.s32.totalorder %s87, %s89
    %p96 = scmp.eq.s32.totalorder %s16, 1
    %p97 = por %p95, %p96
    %p98 = scmp.ne.s32.totalorder %s89, %s90
    %p99 = scmp.eq.s32.totalorder %s16, 0
    %p100 = por %p98, %p99
    %p101 = scmp.ne.s32.totalorder %s89, %s90
    %p102 = scmp.eq.s32.totalorder %s17, 1
    %p103 = por %p101, %p102
    %p105 = scmp.ne.s32.totalorder %s90, %s104
    %p106 = scmp.eq.s32.totalorder %s17, 0
    %p107 = por %p105, %p106
    %s109 = sadd.s32 %s108, 1
    %p112 = scmp.eq.s32.totalorder %s11, 1
    %p113 = scmp.ne.s32.totalorder %s108, %s110
    %p114 = scmp.eq.s32.totalorder %s11, 0
    %p115 = por %p113, %p114
    %p116 = scmp.ne.s32.totalorder %s108, %s110
    %p117 = scmp.eq.s32.totalorder %s16, 1
    %p118 = por %p116, %p117
    %p119 = scmp.ne.s32.totalorder %s110, %s111
    %p120 = scmp.eq.s32.totalorder %s16, 0
    %p121 = por %p119, %p120
    %p122 = scmp.ne.s32.totalorder %s110, %s111
    %p123 = scmp.eq.s32.totalorder %s17, 1
    %p124 = por %p122, %p123
    %p126 = scmp.ne.s32.totalorder %s111, %s125
    %p127 = scmp.eq.s32.totalorder %s17, 0
    %p128 = por %p126, %p127
    %s129 = ssub.s32 %s11, %s18
    %p130 = scmp.eq.s32.totalorder %s129, 0
    %s132 = sadd.s32 %s131, 1
    %s133 = scalar_select %p130, %s131, %s132
    %p136 = pneg %p130
    %p137 = scmp.eq.s32.totalorder %s11, 1
    %p138 = por %p136, %p137
    %p139 = scmp.ne.s32.totalorder %s131, %s134
    %p140 = scmp.eq.s32.totalorder %s11, 0
    %p141 = por %p139, %p140
    %p142 = scmp.ne.s32.totalorder %s131, %s134
    %p143 = scmp.eq.s32.totalorder %s16, 1
    %p144 = por %p142, %p143
    %p145 = scmp.ne.s32.totalorder %s134, %s135
    %p146 = scmp.eq.s32.totalorder %s16, 0
    %p147 = por %p145, %p146
    %p148 = scmp.ne.s32.totalorder %s134, %s135
    %p149 = scmp.eq.s32.totalorder %s17, 1
    %p150 = por %p148, %p149
    %p152 = scmp.ne.s32.totalorder %s135, %s151
    %p153 = scmp.eq.s32.totalorder %s17, 0
    %p154 = por %p152, %p153
    %p155 = scmp.le.s32.totalorder 1, %s11
    %p156 = scmp.lt.s32.totalorder %s11, 3
    %p157 = pnand %p155, %p156
    %p158 = pneg %p157
    // Predicated region
    $region9: #{titanic_forward.1} parent=5 // pred_check
      _
    $region10: #{titanic_forward.1} parent=5 // pred_check_branch
      %160 = sbr.rel (%p157) target = $region12
    $region11: #{titanic_forward.1} parent=5 // pred_region
      %s161 = ssub.s32 %s11, 1
      // Predicated region
      $region13: #{titanic_forward.1} parent=11 // pred_check
        %p162 = pneg %p58
      $region14: #{titanic_forward.1} parent=11 // pred_check_branch
        %164 = sbr.rel (%p162) target = $region16
      $region15: #{titanic_forward.1} parent=11 // pred_region
        _
      $region16: #{titanic_forward.1} parent=11 // pred_fallthru
        _
      // Predicated region
      $region17: #{titanic_forward.1} parent=11 // pred_check
        %p165 = pneg %p79
      $region18: #{titanic_forward.1} parent=11 // pred_check_branch
        %167 = sbr.rel (%p165) target = $region20
      $region19: #{titanic_forward.1} parent=11 // pred_region
        _
      $region20: #{titanic_forward.1} parent=11 // pred_fallthru
        _
      // Predicated region
      $region21: #{titanic_forward.1} parent=11 // pred_check
        %p168 = pneg %p100
      $region22: #{titanic_forward.1} parent=11 // pred_check_branch
        %170 = sbr.rel (%p168) target = $region24
      $region23: #{titanic_forward.1} parent=11 // pred_region
        _
      $region24: #{titanic_forward.1} parent=11 // pred_fallthru
        _
      // Predicated region
      $region25: #{titanic_forward.1} parent=11 // pred_check
        %p171 = pneg %p121
      $region26: #{titanic_forward.1} parent=11 // pred_check_branch
        %173 = sbr.rel (%p171) target = $region28
      $region27: #{titanic_forward.1} parent=11 // pred_region
        _
      $region28: #{titanic_forward.1} parent=11 // pred_fallthru
        _
    $region12: #{titanic_forward.1} parent=5 // pred_fallthru
      _
    %p174 = scmp.lt.s32.totalorder %s11, 2
    // Predicated region
    $region29: #{titanic_forward.1} parent=5 // pred_check
      %p175 = pneg %p174
    $region30: #{titanic_forward.1} parent=5 // pred_check_branch
      %177 = sbr.rel (%p175) target = $region32
    $region31: #{titanic_forward.1} parent=5 // pred_region
      // Predicated region
      $region33: #{titanic_forward.1} parent=31 // pred_check
        %p178 = pneg %p31
      $region34: #{titanic_forward.1} parent=31 // pred_check_branch
        %180 = sbr.rel (%p178) target = $region36
      $region35: #{titanic_forward.1} parent=31 // pred_region
        %s181 = smul.u32 16, %s11
        %p182 = scmp.lt.s32.totalorder %s181, 31
        %s183 = scalar_select %p182, %s181, 31
        %s184 = smul.addr %s183, 8
        %s185 = scalar_lea.vmem %s0, %s184
        %s186 = smul.u32 16, %s11
      $region36: #{titanic_forward.1} parent=31 // pred_fallthru
        _
    $region32: #{titanic_forward.1} parent=5 // pred_fallthru
      _
    %p187 = scmp.le.s32.totalorder 1, %s11
    %p188 = scmp.lt.s32.totalorder %s11, 3
    %p189 = pnand %p187, %p188
    %p190 = pneg %p189
    // Predicated region
    $region37: #{titanic_forward.1} parent=5 // pred_check
      _
    $region38: #{titanic_forward.1} parent=5 // pred_check_branch
      %192 = sbr.rel (%p189) target = $region40
    $region39: #{titanic_forward.1} parent=5 // pred_region
      %s193 = ssub.s32 %s11, 1
      %s194 = smul.u32 16, %s16
      %p195 = scmp.lt.s32.totalorder %s194, 31
      %s196 = scalar_select %p195, %s194, 31
      %s197 = smul.addr %s196, 8
      %s198 = scalar_lea.vmem %s0, %s197
      %p199 = pneg %p37
      %p200 = pneg %p34
      %p201 = pneg %p58
      %p202 = pneg %p55
      %p203 = pneg %p79
      %p204 = pneg %p76
      %p205 = pneg %p100
      %p206 = pneg %p97
      %p207 = pneg %p121
      %p208 = pneg %p118
      %p209 = pneg %p147
      %p210 = pneg %p144
      %p211 = scmp.lt.s32.totalorder %s16, 1
      %s212 = scalar_select %p211, %s16, 1
      %s213 = smul.addr %s212, 8
      %s214 = scalar_lea.vmem %s5, %s213
      %s215 = smul.u32 16, %s16
      %p216 = scmp.lt.s32.totalorder %s215, 31
      %s217 = scalar_select %p216, %s215, 31
      %s218 = smul.addr %s217, 8
      %s219 = scalar_lea.vmem %s0, %s218
      %s220 = smul.u32 16, %s16
      %p221 = scmp.lt.s32.totalorder %s16, 1
      %s222 = scalar_select %p221, %s16, 1
      %s223 = smul.addr %s222, 8
      %s224 = scalar_lea.vmem %s5, %s223
      %v226 = vld [vmem:[%s219] sm:$0xff]
      %v227 = vld [vmem:[%s219 + $0x8] sm:$0xff]
      %v228 = vld [vmem:[%s219 + $0x10] sm:$0xff]
      %v229 = vld [vmem:[%s219 + $0x18] sm:$0xff]
      %v230 = vld [vmem:[%s219 + $0x20] sm:$0xff]
      %v231 = vld [vmem:[%s219 + $0x28] sm:$0xff]
      %v232 = vld [vmem:[%s219 + $0x30] sm:$0xff]
      %v233 = vld [vmem:[%s219 + $0x38] sm:$0xff]
      %v234 = vld [vmem:[%s219 + $0x40] sm:$0xff]
      %v235 = vld [vmem:[%s219 + $0x48] sm:$0xff]
      %v236 = vld [vmem:[%s219 + $0x50] sm:$0xff]
      %v237 = vld [vmem:[%s219 + $0x58] sm:$0xff]
      %v238 = vld [vmem:[%s219 + $0x60] sm:$0xff]
      %v239 = vld [vmem:[%s219 + $0x68] sm:$0xff]
      %v240 = vld [vmem:[%s219 + $0x70] sm:$0xff]
      %v241 = vld [vmem:[%s219 + $0x78] sm:$0xff]
      %v242 = vlaneseq
      %v243 = vand.u32 %v242, 127
      %244 = vset.pattern.permute.xlu0 0
      %245 = vperm.xlu0 %244, %v226
      %v246 = vpop.permute.xlu0 %245
      %247 = vset.pattern.permute.xlu0 0
      %248 = vperm.xlu0 %247, %v227
      %v249 = vpop.permute.xlu0 %248
      %250 = vset.pattern.permute.xlu0 0
      %251 = vperm.xlu0 %250, %v228
      %v252 = vpop.permute.xlu0 %251
      %253 = vset.pattern.permute.xlu0 0
      %254 = vperm.xlu0 %253, %v229
      %v255 = vpop.permute.xlu0 %254
      %256 = vset.pattern.permute.xlu0 0
      %257 = vperm.xlu0 %256, %v230
      %v258 = vpop.permute.xlu0 %257
      %259 = vset.pattern.permute.xlu0 0
      %260 = vperm.xlu0 %259, %v231
      %v261 = vpop.permute.xlu0 %260
      %262 = vset.pattern.permute.xlu0 0
      %263 = vperm.xlu0 %262, %v232
      %v264 = vpop.permute.xlu0 %263
      %265 = vset.pattern.permute.xlu0 0
      %266 = vperm.xlu0 %265, %v233
      %v267 = vpop.permute.xlu0 %266
      %268 = vset.pattern.permute.xlu0 0
      %269 = vperm.xlu0 %268, %v234
      %v270 = vpop.permute.xlu0 %269
      %271 = vset.pattern.permute.xlu0 0
      %272 = vperm.xlu0 %271, %v235
      %v273 = vpop.permute.xlu0 %272
      %274 = vset.pattern.permute.xlu0 0
      %275 = vperm.xlu0 %274, %v236
      %v276 = vpop.permute.xlu0 %275
      %277 = vset.pattern.permute.xlu0 0
      %278 = vperm.xlu0 %277, %v237
      %v279 = vpop.permute.xlu0 %278
      %280 = vset.pattern.permute.xlu0 0
      %281 = vperm.xlu0 %280, %v238
      %v282 = vpop.permute.xlu0 %281
      %283 = vset.pattern.permute.xlu0 0
      %284 = vperm.xlu0 %283, %v239
      %v285 = vpop.permute.xlu0 %284
      %286 = vset.pattern.permute.xlu0 0
      %287 = vperm.xlu0 %286, %v240
      %v288 = vpop.permute.xlu0 %287
      %289 = vset.pattern.permute.xlu0 0
      %290 = vperm.xlu0 %289, %v241
      %v291 = vpop.permute.xlu0 %290
      %vm292 = vcmp.eq.s32.totalorder %v243, %v246
      %vm293 = vcmp.eq.s32.totalorder %v243, %v249
      %vm294 = vcmp.eq.s32.totalorder %v243, %v252
      %vm295 = vcmp.eq.s32.totalorder %v243, %v255
      %vm296 = vcmp.eq.s32.totalorder %v243, %v258
      %vm297 = vcmp.eq.s32.totalorder %v243, %v261
      %vm298 = vcmp.eq.s32.totalorder %v243, %v264
      %vm299 = vcmp.eq.s32.totalorder %v243, %v267
      %vm300 = vcmp.eq.s32.totalorder %v243, %v270
      %vm301 = vcmp.eq.s32.totalorder %v243, %v273
      %vm302 = vcmp.eq.s32.totalorder %v243, %v276
      %vm303 = vcmp.eq.s32.totalorder %v243, %v279
      %vm304 = vcmp.eq.s32.totalorder %v243, %v282
      %vm305 = vcmp.eq.s32.totalorder %v243, %v285
      %vm306 = vcmp.eq.s32.totalorder %v243, %v288
      %vm307 = vcmp.eq.s32.totalorder %v243, %v291
      %308 = vset.pattern.permute.xlu0 1
      %309 = vperm.xlu0 %308, %v226
      %v310 = vpop.permute.xlu0 %309
      %311 = vset.pattern.permute.xlu0 1
      %312 = vperm.xlu0 %311, %v227
      %v313 = vpop.permute.xlu0 %312
      %314 = vset.pattern.permute.xlu0 1
      %315 = vperm.xlu0 %314, %v228
      %v316 = vpop.permute.xlu0 %315
      %317 = vset.pattern.permute.xlu0 1
      %318 = vperm.xlu0 %317, %v229
      %v319 = vpop.permute.xlu0 %318
      %320 = vset.pattern.permute.xlu0 1
      %321 = vperm.xlu0 %320, %v230
      %v322 = vpop.permute.xlu0 %321
      %323 = vset.pattern.permute.xlu0 1
      %324 = vperm.xlu0 %323, %v231
      %v325 = vpop.permute.xlu0 %324
      %326 = vset.pattern.permute.xlu0 1
      %327 = vperm.xlu0 %326, %v232
      %v328 = vpop.permute.xlu0 %327
      %329 = vset.pattern.permute.xlu0 1
      %330 = vperm.xlu0 %329, %v233
      %v331 = vpop.permute.xlu0 %330
      %332 = vset.pattern.permute.xlu0 1
      %333 = vperm.xlu0 %332, %v234
      %v334 = vpop.permute.xlu0 %333
      %335 = vset.pattern.permute.xlu0 1
      %336 = vperm.xlu0 %335, %v235
      %v337 = vpop.permute.xlu0 %336
      %338 = vset.pattern.permute.xlu0 1
      %339 = vperm.xlu0 %338, %v236
      %v340 = vpop.permute.xlu0 %339
      %341 = vset.pattern.permute.xlu0 1
      %342 = vperm.xlu0 %341, %v237
      %v343 = vpop.permute.xlu0 %342
      %344 = vset.pattern.permute.xlu0 1
      %345 = vperm.xlu0 %344, %v238
      %v346 = vpop.permute.xlu0 %345
      %347 = vset.pattern.permute.xlu0 1
      %348 = vperm.xlu0 %347, %v239
      %v349 = vpop.permute.xlu0 %348
      %350 = vset.pattern.permute.xlu0 1
      %351 = vperm.xlu0 %350, %v240
      %v352 = vpop.permute.xlu0 %351
      %353 = vset.pattern.permute.xlu0 1
      %354 = vperm.xlu0 %353, %v241
      %v355 = vpop.permute.xlu0 %354
      %vm356 = vcmp.eq.s32.totalorder %v243, %v310
      %vm357 = vcmp.eq.s32.totalorder %v243, %v313
      %vm358 = vcmp.eq.s32.totalorder %v243, %v316
      %vm359 = vcmp.eq.s32.totalorder %v243, %v319
      %vm360 = vcmp.eq.s32.totalorder %v243, %v322
      %vm361 = vcmp.eq.s32.totalorder %v243, %v325
      %vm362 = vcmp.eq.s32.totalorder %v243, %v328
      %vm363 = vcmp.eq.s32.totalorder %v243, %v331
      %vm364 = vcmp.eq.s32.totalorder %v243, %v334
      %vm365 = vcmp.eq.s32.totalorder %v243, %v337
      %vm366 = vcmp.eq.s32.totalorder %v243, %v340
      %vm367 = vcmp.eq.s32.totalorder %v243, %v343
      %vm368 = vcmp.eq.s32.totalorder %v243, %v346
      %vm369 = vcmp.eq.s32.totalorder %v243, %v349
      %vm370 = vcmp.eq.s32.totalorder %v243, %v352
      %vm371 = vcmp.eq.s32.totalorder %v243, %v355
      %vm372 = vmor %vm292, %vm356
      %vm373 = vmor %vm293, %vm357
      %vm374 = vmor %vm294, %vm358
      %vm375 = vmor %vm295, %vm359
      %vm376 = vmor %vm296, %vm360
      %vm377 = vmor %vm297, %vm361
      %vm378 = vmor %vm298, %vm362
      %vm379 = vmor %vm299, %vm363
      %vm380 = vmor %vm300, %vm364
      %vm381 = vmor %vm301, %vm365
      %vm382 = vmor %vm302, %vm366
      %vm383 = vmor %vm303, %vm367
      %vm384 = vmor %vm304, %vm368
      %vm385 = vmor %vm305, %vm369
      %vm386 = vmor %vm306, %vm370
      %vm387 = vmor %vm307, %vm371
      %388 = vset.pattern.permute.xlu0 2
      %389 = vperm.xlu0 %388, %v226
      %v390 = vpop.permute.xlu0 %389
      %391 = vset.pattern.permute.xlu0 2
      %392 = vperm.xlu0 %391, %v227
      %v393 = vpop.permute.xlu0 %392
      %394 = vset.pattern.permute.xlu0 2
      %395 = vperm.xlu0 %394, %v228
      %v396 = vpop.permute.xlu0 %395
      %397 = vset.pattern.permute.xlu0 2
      %398 = vperm.xlu0 %397, %v229
      %v399 = vpop.permute.xlu0 %398
      %400 = vset.pattern.permute.xlu0 2
      %401 = vperm.xlu0 %400, %v230
      %v402 = vpop.permute.xlu0 %401
      %403 = vset.pattern.permute.xlu0 2
      %404 = vperm.xlu0 %403, %v231
      %v405 = vpop.permute.xlu0 %404
      %406 = vset.pattern.permute.xlu0 2
      %407 = vperm.xlu0 %406, %v232
      %v408 = vpop.permute.xlu0 %407
      %409 = vset.pattern.permute.xlu0 2
      %410 = vperm.xlu0 %409, %v233
      %v411 = vpop.permute.xlu0 %410
      %412 = vset.pattern.permute.xlu0 2
      %413 = vperm.xlu0 %412, %v234
      %v414 = vpop.permute.xlu0 %413
      %415 = vset.pattern.permute.xlu0 2
      %416 = vperm.xlu0 %415, %v235
      %v417 = vpop.permute.xlu0 %416
      %418 = vset.pattern.permute.xlu0 2
      %419 = vperm.xlu0 %418, %v236
      %v420 = vpop.permute.xlu0 %419
      %421 = vset.pattern.permute.xlu0 2
      %422 = vperm.xlu0 %421, %v237
      %v423 = vpop.permute.xlu0 %422
      %424 = vset.pattern.permute.xlu0 2
      %425 = vperm.xlu0 %424, %v238
      %v426 = vpop.permute.xlu0 %425
      %427 = vset.pattern.permute.xlu0 2
      %428 = vperm.xlu0 %427, %v239
      %v429 = vpop.permute.xlu0 %428
      %430 = vset.pattern.permute.xlu0 2
      %431 = vperm.xlu0 %430, %v240
      %v432 = vpop.permute.xlu0 %431
      %433 = vset.pattern.permute.xlu0 2
      %434 = vperm.xlu0 %433, %v241
      %v435 = vpop.permute.xlu0 %434
      %vm436 = vcmp.eq.s32.totalorder %v243, %v390
      %vm437 = vcmp.eq.s32.totalorder %v243, %v393
      %vm438 = vcmp.eq.s32.totalorder %v243, %v396
      %vm439 = vcmp.eq.s32.totalorder %v243, %v399
      %vm440 = vcmp.eq.s32.totalorder %v243, %v402
      %vm441 = vcmp.eq.s32.totalorder %v243, %v405
      %vm442 = vcmp.eq.s32.totalorder %v243, %v408
      %vm443 = vcmp.eq.s32.totalorder %v243, %v411
      %vm444 = vcmp.eq.s32.totalorder %v243, %v414
      %vm445 = vcmp.eq.s32.totalorder %v243, %v417
      %vm446 = vcmp.eq.s32.totalorder %v243, %v420
      %vm447 = vcmp.eq.s32.totalorder %v243, %v423
      %vm448 = vcmp.eq.s32.totalorder %v243, %v426
      %vm449 = vcmp.eq.s32.totalorder %v243, %v429
      %vm450 = vcmp.eq.s32.totalorder %v243, %v432
      %vm451 = vcmp.eq.s32.totalorder %v243, %v435
      %vm452 = vmor %vm372, %vm436
      %vm453 = vmor %vm373, %vm437
      %vm454 = vmor %vm374, %vm438
      %vm455 = vmor %vm375, %vm439
      %vm456 = vmor %vm376, %vm440
      %vm457 = vmor %vm377, %vm441
      %vm458 = vmor %vm378, %vm442
      %vm459 = vmor %vm379, %vm443
      %vm460 = vmor %vm380, %vm444
      %vm461 = vmor %vm381, %vm445
      %vm462 = vmor %vm382, %vm446
      %vm463 = vmor %vm383, %vm447
      %vm464 = vmor %vm384, %vm448
      %vm465 = vmor %vm385, %vm449
      %vm466 = vmor %vm386, %vm450
      %vm467 = vmor %vm387, %vm451
      %468 = vset.pattern.permute.xlu0 3
      %469 = vperm.xlu0 %468, %v226
      %v470 = vpop.permute.xlu0 %469
      %471 = vset.pattern.permute.xlu0 3
      %472 = vperm.xlu0 %471, %v227
      %v473 = vpop.permute.xlu0 %472
      %474 = vset.pattern.permute.xlu0 3
      %475 = vperm.xlu0 %474, %v228
      %v476 = vpop.permute.xlu0 %475
      %477 = vset.pattern.permute.xlu0 3
      %478 = vperm.xlu0 %477, %v229
      %v479 = vpop.permute.xlu0 %478
      %480 = vset.pattern.permute.xlu0 3
      %481 = vperm.xlu0 %480, %v230
      %v482 = vpop.permute.xlu0 %481
      %483 = vset.pattern.permute.xlu0 3
      %484 = vperm.xlu0 %483, %v231
      %v485 = vpop.permute.xlu0 %484
      %486 = vset.pattern.permute.xlu0 3
      %487 = vperm.xlu0 %486, %v232
      %v488 = vpop.permute.xlu0 %487
      %489 = vset.pattern.permute.xlu0 3
      %490 = vperm.xlu0 %489, %v233
      %v491 = vpop.permute.xlu0 %490
      %492 = vset.pattern.permute.xlu0 3
      %493 = vperm.xlu0 %492, %v234
      %v494 = vpop.permute.xlu0 %493
      %495 = vset.pattern.permute.xlu0 3
      %496 = vperm.xlu0 %495, %v235
      %v497 = vpop.permute.xlu0 %496
      %498 = vset.pattern.permute.xlu0 3
      %499 = vperm.xlu0 %498, %v236
      %v500 = vpop.permute.xlu0 %499
      %501 = vset.pattern.permute.xlu0 3
      %502 = vperm.xlu0 %501, %v237
      %v503 = vpop.permute.xlu0 %502
      %504 = vset.pattern.permute.xlu0 3
      %505 = vperm.xlu0 %504, %v238
      %v506 = vpop.permute.xlu0 %505
      %507 = vset.pattern.permute.xlu0 3
      %508 = vperm.xlu0 %507, %v239
      %v509 = vpop.permute.xlu0 %508
      %510 = vset.pattern.permute.xlu0 3
      %511 = vperm.xlu0 %510, %v240
      %v512 = vpop.permute.xlu0 %511
      %513 = vset.pattern.permute.xlu0 3
      %514 = vperm.xlu0 %513, %v241
      %v515 = vpop.permute.xlu0 %514
      %vm516 = vcmp.eq.s32.totalorder %v243, %v470
      %vm517 = vcmp.eq.s32.totalorder %v243, %v473
      %vm518 = vcmp.eq.s32.totalorder %v243, %v476
      %vm519 = vcmp.eq.s32.totalorder %v243, %v479
      %vm520 = vcmp.eq.s32.totalorder %v243, %v482
      %vm521 = vcmp.eq.s32.totalorder %v243, %v485
      %vm522 = vcmp.eq.s32.totalorder %v243, %v488
      %vm523 = vcmp.eq.s32.totalorder %v243, %v491
      %vm524 = vcmp.eq.s32.totalorder %v243, %v494
      %vm525 = vcmp.eq.s32.totalorder %v243, %v497
      %vm526 = vcmp.eq.s32.totalorder %v243, %v500
      %vm527 = vcmp.eq.s32.totalorder %v243, %v503
      %vm528 = vcmp.eq.s32.totalorder %v243, %v506
      %vm529 = vcmp.eq.s32.totalorder %v243, %v509
      %vm530 = vcmp.eq.s32.totalorder %v243, %v512
      %vm531 = vcmp.eq.s32.totalorder %v243, %v515
      %vm532 = vmor %vm452, %vm516
      %vm533 = vmor %vm453, %vm517
      %vm534 = vmor %vm454, %vm518
      %vm535 = vmor %vm455, %vm519
      %vm536 = vmor %vm456, %vm520
      %vm537 = vmor %vm457, %vm521
      %vm538 = vmor %vm458, %vm522
      %vm539 = vmor %vm459, %vm523
      %vm540 = vmor %vm460, %vm524
      %vm541 = vmor %vm461, %vm525
      %vm542 = vmor %vm462, %vm526
      %vm543 = vmor %vm463, %vm527
      %vm544 = vmor %vm464, %vm528
      %vm545 = vmor %vm465, %vm529
      %vm546 = vmor %vm466, %vm530
      %vm547 = vmor %vm467, %vm531
      %548 = vset.pattern.permute.xlu0 4
      %549 = vperm.xlu0 %548, %v226
      %v550 = vpop.permute.xlu0 %549
      %551 = vset.pattern.permute.xlu0 4
      %552 = vperm.xlu0 %551, %v227
      %v553 = vpop.permute.xlu0 %552
      %554 = vset.pattern.permute.xlu0 4
      %555 = vperm.xlu0 %554, %v228
      %v556 = vpop.permute.xlu0 %555
      %557 = vset.pattern.permute.xlu0 4
      %558 = vperm.xlu0 %557, %v229
      %v559 = vpop.permute.xlu0 %558
      %560 = vset.pattern.permute.xlu0 4
      %561 = vperm.xlu0 %560, %v230
      %v562 = vpop.permute.xlu0 %561
      %563 = vset.pattern.permute.xlu0 4
      %564 = vperm.xlu0 %563, %v231
      %v565 = vpop.permute.xlu0 %564
      %566 = vset.pattern.permute.xlu0 4
      %567 = vperm.xlu0 %566, %v232
      %v568 = vpop.permute.xlu0 %567
      %569 = vset.pattern.permute.xlu0 4
      %570 = vperm.xlu0 %569, %v233
      %v571 = vpop.permute.xlu0 %570
      %572 = vset.pattern.permute.xlu0 4
      %573 = vperm.xlu0 %572, %v234
      %v574 = vpop.permute.xlu0 %573
      %575 = vset.pattern.permute.xlu0 4
      %576 = vperm.xlu0 %575, %v235
      %v577 = vpop.permute.xlu0 %576
      %578 = vset.pattern.permute.xlu0 4
      %579 = vperm.xlu0 %578, %v236
      %v580 = vpop.permute.xlu0 %579
      %581 = vset.pattern.permute.xlu0 4
      %582 = vperm.xlu0 %581, %v237
      %v583 = vpop.permute.xlu0 %582
      %584 = vset.pattern.permute.xlu0 4
      %585 = vperm.xlu0 %584, %v238
      %v586 = vpop.permute.xlu0 %585
      %587 = vset.pattern.permute.xlu0 4
      %588 = vperm.xlu0 %587, %v239
      %v589 = vpop.permute.xlu0 %588
      %590 = vset.pattern.permute.xlu0 4
      %591 = vperm.xlu0 %590, %v240
      %v592 = vpop.permute.xlu0 %591
      %593 = vset.pattern.permute.xlu0 4
      %594 = vperm.xlu0 %593, %v241
      %v595 = vpop.permute.xlu0 %594
      %vm596 = vcmp.eq.s32.totalorder %v243, %v550
      %vm597 = vcmp.eq.s32.totalorder %v243, %v553
      %vm598 = vcmp.eq.s32.totalorder %v243, %v556
      %vm599 = vcmp.eq.s32.totalorder %v243, %v559
      %vm600 = vcmp.eq.s32.totalorder %v243, %v562
      %vm601 = vcmp.eq.s32.totalorder %v243, %v565
      %vm602 = vcmp.eq.s32.totalorder %v243, %v568
      %vm603 = vcmp.eq.s32.totalorder %v243, %v571
      %vm604 = vcmp.eq.s32.totalorder %v243, %v574
      %vm605 = vcmp.eq.s32.totalorder %v243, %v577
      %vm606 = vcmp.eq.s32.totalorder %v243, %v580
      %vm607 = vcmp.eq.s32.totalorder %v243, %v583
      %vm608 = vcmp.eq.s32.totalorder %v243, %v586
      %vm609 = vcmp.eq.s32.totalorder %v243, %v589
      %vm610 = vcmp.eq.s32.totalorder %v243, %v592
      %vm611 = vcmp.eq.s32.totalorder %v243, %v595
      %vm612 = vmor %vm532, %vm596
      %vm613 = vmor %vm533, %vm597
      %vm614 = vmor %vm534, %vm598
      %vm615 = vmor %vm535, %vm599
      %vm616 = vmor %vm536, %vm600
      %vm617 = vmor %vm537, %vm601
      %vm618 = vmor %vm538, %vm602
      %vm619 = vmor %vm539, %vm603
      %vm620 = vmor %vm540, %vm604
      %vm621 = vmor %vm541, %vm605
      %vm622 = vmor %vm542, %vm606
      %vm623 = vmor %vm543, %vm607
      %vm624 = vmor %vm544, %vm608
      %vm625 = vmor %vm545, %vm609
      %vm626 = vmor %vm546, %vm610
      %vm627 = vmor %vm547, %vm611
      %628 = vset.pattern.permute.xlu0 5
      %629 = vperm.xlu0 %628, %v226
      %v630 = vpop.permute.xlu0 %629
      %631 = vset.pattern.permute.xlu0 5
      %632 = vperm.xlu0 %631, %v227
      %v633 = vpop.permute.xlu0 %632
      %634 = vset.pattern.permute.xlu0 5
      %635 = vperm.xlu0 %634, %v228
      %v636 = vpop.permute.xlu0 %635
      %637 = vset.pattern.permute.xlu0 5
      %638 = vperm.xlu0 %637, %v229
      %v639 = vpop.permute.xlu0 %638
      %640 = vset.pattern.permute.xlu0 5
      %641 = vperm.xlu0 %640, %v230
      %v642 = vpop.permute.xlu0 %641
      %643 = vset.pattern.permute.xlu0 5
      %644 = vperm.xlu0 %643, %v231
      %v645 = vpop.permute.xlu0 %644
      %646 = vset.pattern.permute.xlu0 5
      %647 = vperm.xlu0 %646, %v232
      %v648 = vpop.permute.xlu0 %647
      %649 = vset.pattern.permute.xlu0 5
      %650 = vperm.xlu0 %649, %v233
      %v651 = vpop.permute.xlu0 %650
      %652 = vset.pattern.permute.xlu0 5
      %653 = vperm.xlu0 %652, %v234
      %v654 = vpop.permute.xlu0 %653
      %655 = vset.pattern.permute.xlu0 5
      %656 = vperm.xlu0 %655, %v235
      %v657 = vpop.permute.xlu0 %656
      %658 = vset.pattern.permute.xlu0 5
      %659 = vperm.xlu0 %658, %v236
      %v660 = vpop.permute.xlu0 %659
      %661 = vset.pattern.permute.xlu0 5
      %662 = vperm.xlu0 %661, %v237
      %v663 = vpop.permute.xlu0 %662
      %664 = vset.pattern.permute.xlu0 5
      %665 = vperm.xlu0 %664, %v238
      %v666 = vpop.permute.xlu0 %665
      %667 = vset.pattern.permute.xlu0 5
      %668 = vperm.xlu0 %667, %v239
      %v669 = vpop.permute.xlu0 %668
      %670 = vset.pattern.permute.xlu0 5
      %671 = vperm.xlu0 %670, %v240
      %v672 = vpop.permute.xlu0 %671
      %673 = vset.pattern.permute.xlu0 5
      %674 = vperm.xlu0 %673, %v241
      %v675 = vpop.permute.xlu0 %674
      %vm676 = vcmp.eq.s32.totalorder %v243, %v630
      %vm677 = vcmp.eq.s32.totalorder %v243, %v633
      %vm678 = vcmp.eq.s32.totalorder %v243, %v636
      %vm679 = vcmp.eq.s32.totalorder %v243, %v639
      %vm680 = vcmp.eq.s32.totalorder %v243, %v642
      %vm681 = vcmp.eq.s32.totalorder %v243, %v645
      %vm682 = vcmp.eq.s32.totalorder %v243, %v648
      %vm683 = vcmp.eq.s32.totalorder %v243, %v651
      %vm684 = vcmp.eq.s32.totalorder %v243, %v654
      %vm685 = vcmp.eq.s32.totalorder %v243, %v657
      %vm686 = vcmp.eq.s32.totalorder %v243, %v660
      %vm687 = vcmp.eq.s32.totalorder %v243, %v663
      %vm688 = vcmp.eq.s32.totalorder %v243, %v666
      %vm689 = vcmp.eq.s32.totalorder %v243, %v669
      %vm690 = vcmp.eq.s32.totalorder %v243, %v672
      %vm691 = vcmp.eq.s32.totalorder %v243, %v675
      %vm692 = vmor %vm612, %vm676
      %vm693 = vmor %vm613, %vm677
      %vm694 = vmor %vm614, %vm678
      %vm695 = vmor %vm615, %vm679
      %vm696 = vmor %vm616, %vm680
      %vm697 = vmor %vm617, %vm681
      %vm698 = vmor %vm618, %vm682
      %vm699 = vmor %vm619, %vm683
      %vm700 = vmor %vm620, %vm684
      %vm701 = vmor %vm621, %vm685
      %vm702 = vmor %vm622, %vm686
      %vm703 = vmor %vm623, %vm687
      %vm704 = vmor %vm624, %vm688
      %vm705 = vmor %vm625, %vm689
      %vm706 = vmor %vm626, %vm690
      %vm707 = vmor %vm627, %vm691
      %vm708 = vcmp.eq.s32.totalorder %v243, 110
      %v709 = vsel %vm708, 1, 0
      %vm710 = vcmp.eq.s32.totalorder %v709, 1
      %vm711 = vmor %vm692, %vm710
      %vm712 = vmor %vm693, %vm710
      %vm713 = vmor %vm694, %vm710
      %vm714 = vmor %vm695, %vm710
      %vm715 = vmor %vm696, %vm710
      %vm716 = vmor %vm697, %vm710
      %vm717 = vmor %vm698, %vm710
      %vm718 = vmor %vm699, %vm710
      %vm719 = vmor %vm700, %vm710
      %vm720 = vmor %vm701, %vm710
      %vm721 = vmor %vm702, %vm710
      %vm722 = vmor %vm703, %vm710
      %vm723 = vmor %vm704, %vm710
      %vm724 = vmor %vm705, %vm710
      %vm725 = vmor %vm706, %vm710
      %vm726 = vmor %vm707, %vm710
      %v727 = vsel %vm711, 1, 0
      %v728 = vsel %vm712, 1, 0
      %v729 = vsel %vm713, 1, 0
      %v730 = vsel %vm714, 1, 0
      %v731 = vsel %vm715, 1, 0
      %v732 = vsel %vm716, 1, 0
      %v733 = vsel %vm717, 1, 0
      %v734 = vsel %vm718, 1, 0
      %v735 = vsel %vm719, 1, 0
      %v736 = vsel %vm720, 1, 0
      %v737 = vsel %vm721, 1, 0
      %v738 = vsel %vm722, 1, 0
      %v739 = vsel %vm723, 1, 0
      %v740 = vsel %vm724, 1, 0
      %v741 = vsel %vm725, 1, 0
      %v742 = vsel %vm726, 1, 0
      %v743 = vcvt.s32.f32 %v727
      %v744 = vcvt.s32.f32 %v728
      %v745 = vcvt.s32.f32 %v729
      %v746 = vcvt.s32.f32 %v730
      %v747 = vcvt.s32.f32 %v731
      %v748 = vcvt.s32.f32 %v732
      %v749 = vcvt.s32.f32 %v733
      %v750 = vcvt.s32.f32 %v734
      %v751 = vcvt.s32.f32 %v735
      %v752 = vcvt.s32.f32 %v736
      %v753 = vcvt.s32.f32 %v737
      %v754 = vcvt.s32.f32 %v738
      %v755 = vcvt.s32.f32 %v739
      %v756 = vcvt.s32.f32 %v740
      %v757 = vcvt.s32.f32 %v741
      %v758 = vcvt.s32.f32 %v742
      %v759 = vpack.c.bf16 %v744, %v743
      %v760 = vpack.c.bf16 %v746, %v745
      %v761 = vpack.c.bf16 %v748, %v747
      %v762 = vpack.c.bf16 %v750, %v749
      %v763 = vpack.c.bf16 %v752, %v751
      %v764 = vpack.c.bf16 %v754, %v753
      %v765 = vpack.c.bf16 %v756, %v755
      %v766 = vpack.c.bf16 %v758, %v757
      %767 = vset.pattern.permute.xlu0 6
      %768 = vperm.xlu0 %767, %v226
      %v769 = vpop.permute.xlu0 %768
      %770 = vset.pattern.permute.xlu0 6
      %771 = vperm.xlu0 %770, %v227
      %v772 = vpop.permute.xlu0 %771
      %773 = vset.pattern.permute.xlu0 6
      %774 = vperm.xlu0 %773, %v228
      %v775 = vpop.permute.xlu0 %774
      %776 = vset.pattern.permute.xlu0 6
      %777 = vperm.xlu0 %776, %v229
      %v778 = vpop.permute.xlu0 %777
      %779 = vset.pattern.permute.xlu0 6
      %780 = vperm.xlu0 %779, %v230
      %v781 = vpop.permute.xlu0 %780
      %782 = vset.pattern.permute.xlu0 6
      %783 = vperm.xlu0 %782, %v231
      %v784 = vpop.permute.xlu0 %783
      %785 = vset.pattern.permute.xlu0 6
      %786 = vperm.xlu0 %785, %v232
      %v787 = vpop.permute.xlu0 %786
      %788 = vset.pattern.permute.xlu0 6
      %789 = vperm.xlu0 %788, %v233
      %v790 = vpop.permute.xlu0 %789
      %791 = vset.pattern.permute.xlu0 6
      %792 = vperm.xlu0 %791, %v234
      %v793 = vpop.permute.xlu0 %792
      %794 = vset.pattern.permute.xlu0 6
      %795 = vperm.xlu0 %794, %v235
      %v796 = vpop.permute.xlu0 %795
      %797 = vset.pattern.permute.xlu0 6
      %798 = vperm.xlu0 %797, %v236
      %v799 = vpop.permute.xlu0 %798
      %800 = vset.pattern.permute.xlu0 6
      %801 = vperm.xlu0 %800, %v237
      %v802 = vpop.permute.xlu0 %801
      %803 = vset.pattern.permute.xlu0 6
      %804 = vperm.xlu0 %803, %v238
      %v805 = vpop.permute.xlu0 %804
      %806 = vset.pattern.permute.xlu0 6
      %807 = vperm.xlu0 %806, %v239
      %v808 = vpop.permute.xlu0 %807
      %809 = vset.pattern.permute.xlu0 6
      %810 = vperm.xlu0 %809, %v240
      %v811 = vpop.permute.xlu0 %810
      %812 = vset.pattern.permute.xlu0 6
      %813 = vperm.xlu0 %812, %v241
      %v814 = vpop.permute.xlu0 %813
      %vm815 = vcmp.eq.s32.totalorder %v243, %v769
      %vm816 = vcmp.eq.s32.totalorder %v243, %v772
      %vm817 = vcmp.eq.s32.totalorder %v243, %v775
      %vm818 = vcmp.eq.s32.totalorder %v243, %v778
      %vm819 = vcmp.eq.s32.totalorder %v243, %v781
      %vm820 = vcmp.eq.s32.totalorder %v243, %v784
      %vm821 = vcmp.eq.s32.totalorder %v243, %v787
      %vm822 = vcmp.eq.s32.totalorder %v243, %v790
      %vm823 = vcmp.eq.s32.totalorder %v243, %v793
      %vm824 = vcmp.eq.s32.totalorder %v243, %v796
      %vm825 = vcmp.eq.s32.totalorder %v243, %v799
      %vm826 = vcmp.eq.s32.totalorder %v243, %v802
      %vm827 = vcmp.eq.s32.totalorder %v243, %v805
      %vm828 = vcmp.eq.s32.totalorder %v243, %v808
      %vm829 = vcmp.eq.s32.totalorder %v243, %v811
      %vm830 = vcmp.eq.s32.totalorder %v243, %v814
      %v831 = vsel %vm815, 1, 0
      %v832 = vsel %vm816, 1, 0
      %v833 = vsel %vm817, 1, 0
      %v834 = vsel %vm818, 1, 0
      %v835 = vsel %vm819, 1, 0
      %v836 = vsel %vm820, 1, 0
      %v837 = vsel %vm821, 1, 0
      %v838 = vsel %vm822, 1, 0
      %v839 = vsel %vm823, 1, 0
      %v840 = vsel %vm824, 1, 0
      %v841 = vsel %vm825, 1, 0
      %v842 = vsel %vm826, 1, 0
      %v843 = vsel %vm827, 1, 0
      %v844 = vsel %vm828, 1, 0
      %v845 = vsel %vm829, 1, 0
      %v846 = vsel %vm830, 1, 0
      %v847 = vcvt.s32.f32 %v831
      %v848 = vcvt.s32.f32 %v832
      %v849 = vcvt.s32.f32 %v833
      %v850 = vcvt.s32.f32 %v834
      %v851 = vcvt.s32.f32 %v835
      %v852 = vcvt.s32.f32 %v836
      %v853 = vcvt.s32.f32 %v837
      %v854 = vcvt.s32.f32 %v838
      %v855 = vcvt.s32.f32 %v839
      %v856 = vcvt.s32.f32 %v840
      %v857 = vcvt.s32.f32 %v841
      %v858 = vcvt.s32.f32 %v842
      %v859 = vcvt.s32.f32 %v843
      %v860 = vcvt.s32.f32 %v844
      %v861 = vcvt.s32.f32 %v845
      %v862 = vcvt.s32.f32 %v846
      %v863 = vpack.c.bf16 %v848, %v847
      %v864 = vpack.c.bf16 %v850, %v849
      %v865 = vpack.c.bf16 %v852, %v851
      %v866 = vpack.c.bf16 %v854, %v853
      %v867 = vpack.c.bf16 %v856, %v855
      %v868 = vpack.c.bf16 %v858, %v857
      %v869 = vpack.c.bf16 %v860, %v859
      %v870 = vpack.c.bf16 %v862, %v861
      %v871 = vld [vmem:[%s1] sm:$0xf]
      %v872 = vld [vmem:[%s1 + $0x4] sm:$0xf]
      %v873 = vld [vmem:[%s1 + $0x8] sm:$0xf]
      %v874 = vld [vmem:[%s1 + $0xc] sm:$0xf]
      %v875 = vld [vmem:[%s1 + $0x10] sm:$0xf]
      %v876 = vld [vmem:[%s1 + $0x14] sm:$0xf]
      %v877 = vld [vmem:[%s1 + $0x18] sm:$0xf]
      %v878 = vld [vmem:[%s1 + $0x1c] sm:$0xf]
      %v879 = vld [vmem:[%s1 + $0x20] sm:$0xf]
      %v880 = vld [vmem:[%s1 + $0x24] sm:$0xf]
      %v881 = vld [vmem:[%s1 + $0x28] sm:$0xf]
      %v882 = vld [vmem:[%s1 + $0x2c] sm:$0xf]
      %v883 = vld [vmem:[%s1 + $0x30] sm:$0xf]
      %v884 = vld [vmem:[%s1 + $0x34] sm:$0xf]
      %v885 = vld [vmem:[%s1 + $0x38] sm:$0xf]
      %v886 = vld [vmem:[%s1 + $0x3c] sm:$0xf]
      %v887 = vld [vmem:[%s1 + $0x40] sm:$0xf]
      %v888 = vld [vmem:[%s1 + $0x44] sm:$0xf]
      %v889 = vld [vmem:[%s1 + $0x48] sm:$0xf]
      %v890 = vld [vmem:[%s1 + $0x4c] sm:$0xf]
      %v891 = vld [vmem:[%s1 + $0x50] sm:$0xf]
      %v892 = vld [vmem:[%s1 + $0x54] sm:$0xf]
      %v893 = vld [vmem:[%s1 + $0x58] sm:$0xf]
      %v894 = vld [vmem:[%s1 + $0x5c] sm:$0xf]
      %v895 = vld [vmem:[%s1 + $0x60] sm:$0xf]
      %v896 = vld [vmem:[%s1 + $0x64] sm:$0xf]
      %v897 = vld [vmem:[%s1 + $0x68] sm:$0xf]
      %v898 = vld [vmem:[%s1 + $0x6c] sm:$0xf]
      %v899 = vld [vmem:[%s1 + $0x70] sm:$0xf]
      %v900 = vld [vmem:[%s1 + $0x74] sm:$0xf]
      %v901 = vld [vmem:[%s1 + $0x78] sm:$0xf]
      %v902 = vld [vmem:[%s1 + $0x7c] sm:$0xf]
      %v919 = vunpack.c.l.b16 %v887
      %v920 = vunpack.c.l.b16 %v888
      %v921 = vunpack.c.l.b16 %v889
      %v922 = vunpack.c.l.b16 %v890
      %v923 = vunpack.c.l.b16 %v891
      %v924 = vunpack.c.l.b16 %v892
      %v925 = vunpack.c.l.b16 %v893
      %v926 = vunpack.c.l.b16 %v894
      %v927 = vunpack.c.l.b16 %v895
      %v928 = vunpack.c.l.b16 %v896
      %v929 = vunpack.c.l.b16 %v897
      %v930 = vunpack.c.l.b16 %v898
      %v931 = vunpack.c.l.b16 %v899
      %v932 = vunpack.c.l.b16 %v900
      %v933 = vunpack.c.l.b16 %v901
      %v934 = vunpack.c.l.b16 %v902
      %v935 = vpack.c.b16 %v920, %v919
      %v936 = vpack.c.b16 %v922, %v921
      %v937 = vpack.c.b16 %v924, %v923
      %v938 = vpack.c.b16 %v926, %v925
      %v939 = vpack.c.b16 %v928, %v927
      %v940 = vpack.c.b16 %v930, %v929
      %v941 = vpack.c.b16 %v932, %v931
      %v942 = vpack.c.b16 %v934, %v933
      %951 = vmatprep.subr.bf16.mxu0 0
      %952 = vmatpush1.bf16.msra.mxu0 %v935
      %953 = vmatprep.subr.bf16.mxu0 0
      %954 = vmatpush1.bf16.msra.mxu0 %v936
      %955 = vmatprep.subr.bf16.mxu0 0
      %956 = vmatpush1.bf16.msra.mxu0 %v937
      %957 = vmatprep.subr.bf16.mxu0 0
      %958 = vmatpush1.bf16.msra.mxu0 %v938
      %959 = vmatprep.subr.bf16.mxu0 0
      %960 = vmatpush1.bf16.msra.mxu0 %v939
      %961 = vmatprep.subr.bf16.mxu0 0
      %962 = vmatpush1.bf16.msra.mxu0 %v940
      %963 = vmatprep.subr.bf16.mxu0 0
      %964 = vmatpush1.bf16.msra.mxu0 %v941
      %965 = vmatprep.subr.bf16.mxu0 0
      %966 = vmatpush1.bf16.msra.mxu0 %v942
      %967 = vmatprep.subr.bf16.mxu0 0
      %968 = vmatpush1.bf16.msra.mxu0 0
      %969 = vmatprep.subr.bf16.mxu0 0
      %970 = vmatpush1.bf16.msra.mxu0 0
      %971 = vmatprep.subr.bf16.mxu0 0
      %972 = vmatpush1.bf16.msra.mxu0 0
      %973 = vmatprep.subr.bf16.mxu0 0
      %974 = vmatpush1.bf16.msra.mxu0 0
      %975 = vmatprep.subr.bf16.mxu0 0
      %976 = vmatpush1.bf16.msra.mxu0 0
      %977 = vmatprep.subr.bf16.mxu0 0
      %978 = vmatpush1.bf16.msra.mxu0 0
      %979 = vmatprep.subr.bf16.mxu0 0
      %980 = vmatpush1.bf16.msra.mxu0 0
      %981 = vmatprep.subr.bf16.mxu0 0
      %982 = vmatpush1.bf16.msra.mxu0 0
      %983 = vmatprep.mubr.bf16.mxu0 0
      %984 = vmatmul.mubr.bf16.gmra.mrb[0].mxu0 %v863
      %v985 = vpop.f32.mrb[0].mxu0
      %v986 = vadd.f32 0.0, %v985
      %v987 = vpop.f32.mrb[0].mxu0
      %v988 = vpop.f32.mrb[0].mxu0
      %v989 = vadd.f32 0.0, %v988
      %v990 = vpop.f32.mrb[0].mxu0
      %991 = vmatprep.mubr.bf16.mxu0 0
      %992 = vmatmul.mubr.bf16.gmra.mrb[0].mxu0 %v864
      %v993 = vpop.f32.mrb[0].mxu0
      %v994 = vadd.f32 0.0, %v993
      %v995 = vpop.f32.mrb[0].mxu0
      %v996 = vpop.f32.mrb[0].mxu0
      %v997 = vadd.f32 0.0, %v996
      %v998 = vpop.f32.mrb[0].mxu0
      %999 = vmatprep.mubr.bf16.mxu0 0
      %1000 = vmatmul.mubr.bf16.gmra.mrb[0].mxu0 %v865
      %v1001 = vpop.f32.mrb[0].mxu0
      %v1002 = vadd.f32 0.0, %v1001
      %v1003 = vpop.f32.mrb[0].mxu0
      %v1004 = vpop.f32.mrb[0].mxu0
      %v1005 = vadd.f32 0.0, %v1004
      %v1006 = vpop.f32.mrb[0].mxu0
      %1007 = vmatprep.mubr.bf16.mxu0 0
      %1008 = vmatmul.mubr.bf16.gmra.mrb[0].mxu0 %v866
      %v1009 = vpop.f32.mrb[0].mxu0
      %v1010 = vadd.f32 0.0, %v1009
      %v1011 = vpop.f32.mrb[0].mxu0
      %v1012 = vpop.f32.mrb[0].mxu0
      %v1013 = vadd.f32 0.0, %v1012
      %v1014 = vpop.f32.mrb[0].mxu0
      %1015 = vmatprep.mubr.bf16.mxu0 0
      %1016 = vmatmul.mubr.bf16.gmra.mrb[0].mxu0 %v867
      %v1017 = vpop.f32.mrb[0].mxu0
      %v1018 = vadd.f32 0.0, %v1017
      %v1019 = vpop.f32.mrb[0].mxu0
      %v1020 = vpop.f32.mrb[0].mxu0
      %v1021 = vadd.f32 0.0, %v1020
      %v1022 = vpop.f32.mrb[0].mxu0
      %1023 = vmatprep.mubr.bf16.mxu0 0
      %1024 = vmatmul.mubr.bf16.gmra.mrb[0].mxu0 %v868
      %v1025 = vpop.f32.mrb[0].mxu0
      %v1026 = vadd.f32 0.0, %v1025
      %v1027 = vpop.f32.mrb[0].mxu0
      %v1028 = vpop.f32.mrb[0].mxu0
      %v1029 = vadd.f32 0.0, %v1028
      %v1030 = vpop.f32.mrb[0].mxu0
      %1031 = vmatprep.mubr.bf16.mxu0 0
      %1032 = vmatmul.mubr.bf16.gmra.mrb[0].mxu0 %v869
      %v1033 = vpop.f32.mrb[0].mxu0
      %v1034 = vadd.f32 0.0, %v1033
      %v1035 = vpop.f32.mrb[0].mxu0
      %v1036 = vpop.f32.mrb[0].mxu0
      %v1037 = vadd.f32 0.0, %v1036
      %v1038 = vpop.f32.mrb[0].mxu0
      %1039 = vmatprep.mubr.bf16.mxu0 0
      %1040 = vmatmul.mubr.bf16.gmra.mrb[0].mxu0 %v870
      %v1041 = vpop.f32.mrb[0].mxu0
      %v1042 = vadd.f32 0.0, %v1041
      %v1043 = vpop.f32.mrb[0].mxu0
      %v1044 = vpop.f32.mrb[0].mxu0
      %v1045 = vadd.f32 0.0, %v1044
      %v1046 = vpop.f32.mrb[0].mxu0
      %1047 = vdwg.mxu0
      %v1064 = vunpack.c.l.b16 %v871
      %v1065 = vunpack.c.l.b16 %v872
      %v1066 = vunpack.c.l.b16 %v873
      %v1067 = vunpack.c.l.b16 %v874
      %v1068 = vunpack.c.l.b16 %v875
      %v1069 = vunpack.c.l.b16 %v876
      %v1070 = vunpack.c.l.b16 %v877
      %v1071 = vunpack.c.l.b16 %v878
      %v1072 = vunpack.c.l.b16 %v879
      %v1073 = vunpack.c.l.b16 %v880
      %v1074 = vunpack.c.l.b16 %v881
      %v1075 = vunpack.c.l.b16 %v882
      %v1076 = vunpack.c.l.b16 %v883
      %v1077 = vunpack.c.l.b16 %v884
      %v1078 = vunpack.c.l.b16 %v885
      %v1079 = vunpack.c.l.b16 %v886
      %v1080 = vpack.c.b16 %v1065, %v1064
      %v1081 = vpack.c.b16 %v1067, %v1066
      %v1082 = vpack.c.b16 %v1069, %v1068
      %v1083 = vpack.c.b16 %v1071, %v1070
      %v1084 = vpack.c.b16 %v1073, %v1072
      %v1085 = vpack.c.b16 %v1075, %v1074
      %v1086 = vpack.c.b16 %v1077, %v1076
      %v1087 = vpack.c.b16 %v1079, %v1078
      %1096 = vmatprep.subr.bf16.mxu0 0
      %1097 = vmatpush1.bf16.msra.mxu0 %v1080
      %1098 = vmatprep.subr.bf16.mxu0 0
      %1099 = vmatpush1.bf16.msra.mxu0 %v1081
      %1100 = vmatprep.subr.bf16.mxu0 0
      %1101 = vmatpush1.bf16.msra.mxu0 %v1082
      %1102 = vmatprep.subr.bf16.mxu0 0
      %1103 = vmatpush1.bf16.msra.mxu0 %v1083
      %1104 = vmatprep.subr.bf16.mxu0 0
      %1105 = vmatpush1.bf16.msra.mxu0 %v1084
      %1106 = vmatprep.subr.bf16.mxu0 0
      %1107 = vmatpush1.bf16.msra.mxu0 %v1085
      %1108 = vmatprep.subr.bf16.mxu0 0
      %1109 = vmatpush1.bf16.msra.mxu0 %v1086
      %1110 = vmatprep.subr.bf16.mxu0 0
      %1111 = vmatpush1.bf16.msra.mxu0 %v1087
      %1112 = vmatprep.subr.bf16.mxu0 0
      %1113 = vmatpush1.bf16.msra.mxu0 0
      %1114 = vmatprep.subr.bf16.mxu0 0
      %1115 = vmatpush1.bf16.msra.mxu0 0
      %1116 = vmatprep.subr.bf16.mxu0 0
      %1117 = vmatpush1.bf16.msra.mxu0 0
      %1118 = vmatprep.subr.bf16.mxu0 0
      %1119 = vmatpush1.bf16.msra.mxu0 0
      %1120 = vmatprep.subr.bf16.mxu0 0
      %1121 = vmatpush1.bf16.msra.mxu0 0
      %1122 = vmatprep.subr.bf16.mxu0 0
      %1123 = vmatpush1.bf16.msra.mxu0 0
      %1124 = vmatprep.subr.bf16.mxu0 0
      %1125 = vmatpush1.bf16.msra.mxu0 0
      %1126 = vmatprep.subr.bf16.mxu0 0
      %1127 = vmatpush1.bf16.msra.mxu0 0
      %1128 = vmatprep.mubr.bf16.mxu0 0
      %1129 = vmatmul.mubr.bf16.gmra.mrb[0].mxu0 %v759
      %v1130 = vpop.f32.mrb[0].mxu0
      %v1131 = vadd.f32 %v986, %v1130
      %v1132 = vpop.f32.mrb[0].mxu0
      %v1133 = vpop.f32.mrb[0].mxu0
      %v1134 = vadd.f32 %v989, %v1133
      %v1135 = vpop.f32.mrb[0].mxu0
      %1136 = vmatprep.mubr.bf16.mxu0 0
      %1137 = vmatmul.mubr.bf16.gmra.mrb[0].mxu0 %v760
      %v1138 = vpop.f32.mrb[0].mxu0
      %v1139 = vadd.f32 %v994, %v1138
      %v1140 = vpop.f32.mrb[0].mxu0
      %v1141 = vpop.f32.mrb[0].mxu0
      %v1142 = vadd.f32 %v997, %v1141
      %v1143 = vpop.f32.mrb[0].mxu0
      %1144 = vmatprep.mubr.bf16.mxu0 0
      %1145 = vmatmul.mubr.bf16.gmra.mrb[0].mxu0 %v761
      %v1146 = vpop.f32.mrb[0].mxu0
      %v1147 = vadd.f32 %v1002, %v1146
      %v1148 = vpop.f32.mrb[0].mxu0
      %v1149 = vpop.f32.mrb[0].mxu0
      %v1150 = vadd.f32 %v1005, %v1149
      %v1151 = vpop.f32.mrb[0].mxu0
      %1152 = vmatprep.mubr.bf16.mxu0 0
      %1153 = vmatmul.mubr.bf16.gmra.mrb[0].mxu0 %v762
      %v1154 = vpop.f32.mrb[0].mxu0
      %v1155 = vadd.f32 %v1010, %v1154
      %v1156 = vpop.f32.mrb[0].mxu0
      %v1157 = vpop.f32.mrb[0].mxu0
      %v1158 = vadd.f32 %v1013, %v1157
      %v1159 = vpop.f32.mrb[0].mxu0
      %1160 = vmatprep.mubr.bf16.mxu0 0
      %1161 = vmatmul.mubr.bf16.gmra.mrb[0].mxu0 %v763
      %v1162 = vpop.f32.mrb[0].mxu0
      %v1163 = vadd.f32 %v1018, %v1162
      %v1164 = vpop.f32.mrb[0].mxu0
      %v1165 = vpop.f32.mrb[0].mxu0
      %v1166 = vadd.f32 %v1021, %v1165
      %v1167 = vpop.f32.mrb[0].mxu0
      %1168 = vmatprep.mubr.bf16.mxu0 0
      %1169 = vmatmul.mubr.bf16.gmra.mrb[0].mxu0 %v764
      %v1170 = vpop.f32.mrb[0].mxu0
      %v1171 = vadd.f32 %v1026, %v1170
      %v1172 = vpop.f32.mrb[0].mxu0
      %v1173 = vpop.f32.mrb[0].mxu0
      %v1174 = vadd.f32 %v1029, %v1173
      %v1175 = vpop.f32.mrb[0].mxu0
      %1176 = vmatprep.mubr.bf16.mxu0 0
      %1177 = vmatmul.mubr.bf16.gmra.mrb[0].mxu0 %v765
      %v1178 = vpop.f32.mrb[0].mxu0
      %v1179 = vadd.f32 %v1034, %v1178
      %v1180 = vpop.f32.mrb[0].mxu0
      %v1181 = vpop.f32.mrb[0].mxu0
      %v1182 = vadd.f32 %v1037, %v1181
      %v1183 = vpop.f32.mrb[0].mxu0
      %1184 = vmatprep.mubr.bf16.mxu0 0
      %1185 = vmatmul.mubr.bf16.gmra.mrb[0].mxu0 %v766
      %v1186 = vpop.f32.mrb[0].mxu0
      %v1187 = vadd.f32 %v1042, %v1186
      %v1188 = vpop.f32.mrb[0].mxu0
      %v1189 = vpop.f32.mrb[0].mxu0
      %v1190 = vadd.f32 %v1045, %v1189
      %v1191 = vpop.f32.mrb[0].mxu0
      %1192 = vdwg.mxu0
      %v1193 = vpack.c.bf16 %v1134, %v1131
      %v1194 = vpack.c.bf16 %v1142, %v1139
      %v1195 = vpack.c.bf16 %v1150, %v1147
      %v1196 = vpack.c.bf16 %v1158, %v1155
      %v1197 = vpack.c.bf16 %v1166, %v1163
      %v1198 = vpack.c.bf16 %v1174, %v1171
      %v1199 = vpack.c.bf16 %v1182, %v1179
      %v1200 = vpack.c.bf16 %v1190, %v1187
      %v1201 = vld [vmem:[%s2] sm:$0xf]
      %v1202 = vld [vmem:[%s2 + $0x4] sm:$0xf]
      %v1203 = vld [vmem:[%s2 + $0x8] sm:$0xf]
      %v1204 = vld [vmem:[%s2 + $0xc] sm:$0xf]
      %v1205 = vld [vmem:[%s2 + $0x10] sm:$0xf]
      %v1206 = vld [vmem:[%s2 + $0x14] sm:$0xf]
      %v1207 = vld [vmem:[%s2 + $0x18] sm:$0xf]
      %v1208 = vld [vmem:[%s2 + $0x1c] sm:$0xf]
      %v1209 = vld [vmem:[%s2 + $0x20] sm:$0xf]
      %v1210 = vld [vmem:[%s2 + $0x24] sm:$0xf]
      %v1211 = vld [vmem:[%s2 + $0x28] sm:$0xf]
      %v1212 = vld [vmem:[%s2 + $0x2c] sm:$0xf]
      %v1213 = vld [vmem:[%s2 + $0x30] sm:$0xf]
      %v1214 = vld [vmem:[%s2 + $0x34] sm:$0xf]
      %v1215 = vld [vmem:[%s2 + $0x38] sm:$0xf]
      %v1216 = vld [vmem:[%s2 + $0x3c] sm:$0xf]
      %v1233 = vunpack.c.l.b16 %v1201
      %v1234 = vunpack.c.l.b16 %v1202
      %v1235 = vunpack.c.l.b16 %v1203
      %v1236 = vunpack.c.l.b16 %v1204
      %v1237 = vunpack.c.l.b16 %v1205
      %v1238 = vunpack.c.l.b16 %v1206
      %v1239 = vunpack.c.l.b16 %v1207
      %v1240 = vunpack.c.l.b16 %v1208
      %v1241 = vunpack.c.l.b16 %v1209
      %v1242 = vunpack.c.l.b16 %v1210
      %v1243 = vunpack.c.l.b16 %v1211
      %v1244 = vunpack.c.l.b16 %v1212
      %v1245 = vunpack.c.l.b16 %v1213
      %v1246 = vunpack.c.l.b16 %v1214
      %v1247 = vunpack.c.l.b16 %v1215
      %v1248 = vunpack.c.l.b16 %v1216
      %v1249 = vpack.c.b16 %v1234, %v1233
      %v1250 = vpack.c.b16 %v1236, %v1235
      %v1251 = vpack.c.b16 %v1238, %v1237
      %v1252 = vpack.c.b16 %v1240, %v1239
      %v1253 = vpack.c.b16 %v1242, %v1241
      %v1254 = vpack.c.b16 %v1244, %v1243
      %v1255 = vpack.c.b16 %v1246, %v1245
      %v1256 = vpack.c.b16 %v1248, %v1247
      %1265 = vmatprep.subr.bf16.mxu0 0
      %1266 = vmatpush1.bf16.msra.mxu0 %v1249
      %1267 = vmatprep.subr.bf16.mxu0 0
      %1268 = vmatpush1.bf16.msra.mxu0 %v1250
      %1269 = vmatprep.subr.bf16.mxu0 0
      %1270 = vmatpush1.bf16.msra.mxu0 %v1251
      %1271 = vmatprep.subr.bf16.mxu0 0
      %1272 = vmatpush1.bf16.msra.mxu0 %v1252
      %1273 = vmatprep.subr.bf16.mxu0 0
      %1274 = vmatpush1.bf16.msra.mxu0 %v1253
      %1275 = vmatprep.subr.bf16.mxu0 0
      %1276 = vmatpush1.bf16.msra.mxu0 %v1254
      %1277 = vmatprep.subr.bf16.mxu0 0
      %1278 = vmatpush1.bf16.msra.mxu0 %v1255
      %1279 = vmatprep.subr.bf16.mxu0 0
      %1280 = vmatpush1.bf16.msra.mxu0 %v1256
      %1281 = vmatprep.subr.bf16.mxu0 0
      %1282 = vmatpush1.bf16.msra.mxu0 0
      %1283 = vmatprep.subr.bf16.mxu0 0
      %1284 = vmatpush1.bf16.msra.mxu0 0
      %1285 = vmatprep.subr.bf16.mxu0 0
      %1286 = vmatpush1.bf16.msra.mxu0 0
      %1287 = vmatprep.subr.bf16.mxu0 0
      %1288 = vmatpush1.bf16.msra.mxu0 0
      %1289 = vmatprep.subr.bf16.mxu0 0
      %1290 = vmatpush1.bf16.msra.mxu0 0
      %1291 = vmatprep.subr.bf16.mxu0 0
      %1292 = vmatpush1.bf16.msra.mxu0 0
      %1293 = vmatprep.subr.bf16.mxu0 0
      %1294 = vmatpush1.bf16.msra.mxu0 0
      %1295 = vmatprep.subr.bf16.mxu0 0
      %1296 = vmatpush1.bf16.msra.mxu0 0
      %1297 = vmatprep.mubr.bf16.mxu0 0
      %1298 = vmatmul.mubr.bf16.gmra.mrb[0].mxu0 %v1193
      %v1299 = vpop.f32.mrb[0].mxu0
      %v1300 = vadd.f32 0.0, %v1299
      %v1301 = vpop.f32.mrb[0].mxu0
      %v1302 = vpop.f32.mrb[0].mxu0
      %v1303 = vadd.f32 0.0, %v1302
      %v1304 = vpop.f32.mrb[0].mxu0
      %1305 = vmatprep.mubr.bf16.mxu0 0
      %1306 = vmatmul.mubr.bf16.gmra.mrb[0].mxu0 %v1194
      %v1307 = vpop.f32.mrb[0].mxu0
      %v1308 = vadd.f32 0.0, %v1307
      %v1309 = vpop.f32.mrb[0].mxu0
      %v1310 = vpop.f32.mrb[0].mxu0
      %v1311 = vadd.f32 0.0, %v1310
      %v1312 = vpop.f32.mrb[0].mxu0
      %1313 = vmatprep.mubr.bf16.mxu0 0
      %1314 = vmatmul.mubr.bf16.gmra.mrb[0].mxu0 %v1195
      %v1315 = vpop.f32.mrb[0].mxu0
      %v1316 = vadd.f32 0.0, %v1315
      %v1317 = vpop.f32.mrb[0].mxu0
      %v1318 = vpop.f32.mrb[0].mxu0
      %v1319 = vadd.f32 0.0, %v1318
      %v1320 = vpop.f32.mrb[0].mxu0
      %1321 = vmatprep.mubr.bf16.mxu0 0
      %1322 = vmatmul.mubr.bf16.gmra.mrb[0].mxu0 %v1196
      %v1323 = vpop.f32.mrb[0].mxu0
      %v1324 = vadd.f32 0.0, %v1323
      %v1325 = vpop.f32.mrb[0].mxu0
      %v1326 = vpop.f32.mrb[0].mxu0
      %v1327 = vadd.f32 0.0, %v1326
      %v1328 = vpop.f32.mrb[0].mxu0
      %1329 = vmatprep.mubr.bf16.mxu0 0
      %1330 = vmatmul.mubr.bf16.gmra.mrb[0].mxu0 %v1197
      %v1331 = vpop.f32.mrb[0].mxu0
      %v1332 = vadd.f32 0.0, %v1331
      %v1333 = vpop.f32.mrb[0].mxu0
      %v1334 = vpop.f32.mrb[0].mxu0
      %v1335 = vadd.f32 0.0, %v1334
      %v1336 = vpop.f32.mrb[0].mxu0
      %1337 = vmatprep.mubr.bf16.mxu0 0
      %1338 = vmatmul.mubr.bf16.gmra.mrb[0].mxu0 %v1198
      %v1339 = vpop.f32.mrb[0].mxu0
      %v1340 = vadd.f32 0.0, %v1339
      %v1341 = vpop.f32.mrb[0].mxu0
      %v1342 = vpop.f32.mrb[0].mxu0
      %v1343 = vadd.f32 0.0, %v1342
      %v1344 = vpop.f32.mrb[0].mxu0
      %1345 = vmatprep.mubr.bf16.mxu0 0
      %1346 = vmatmul.mubr.bf16.gmra.mrb[0].mxu0 %v1199
      %v1347 = vpop.f32.mrb[0].mxu0
      %v1348 = vadd.f32 0.0, %v1347
      %v1349 = vpop.f32.mrb[0].mxu0
      %v1350 = vpop.f32.mrb[0].mxu0
      %v1351 = vadd.f32 0.0, %v1350
      %v1352 = vpop.f32.mrb[0].mxu0
      %1353 = vmatprep.mubr.bf16.mxu0 0
      %1354 = vmatmul.mubr.bf16.gmra.mrb[0].mxu0 %v1200
      %v1355 = vpop.f32.mrb[0].mxu0
      %v1356 = vadd.f32 0.0, %v1355
      %v1357 = vpop.f32.mrb[0].mxu0
      %v1358 = vpop.f32.mrb[0].mxu0
      %v1359 = vadd.f32 0.0, %v1358
      %v1360 = vpop.f32.mrb[0].mxu0
      %1361 = vdwg.mxu0
      %v1362 = vmax.f32 %v1300, 0.0
      %v1363 = vmax.f32 %v1303, 0.0
      %v1364 = vmax.f32 %v1308, 0.0
      %v1365 = vmax.f32 %v1311, 0.0
      %v1366 = vmax.f32 %v1316, 0.0
      %v1367 = vmax.f32 %v1319, 0.0
      %v1368 = vmax.f32 %v1324, 0.0
      %v1369 = vmax.f32 %v1327, 0.0
      %v1370 = vmax.f32 %v1332, 0.0
      %v1371 = vmax.f32 %v1335, 0.0
      %v1372 = vmax.f32 %v1340, 0.0
      %v1373 = vmax.f32 %v1343, 0.0
      %v1374 = vmax.f32 %v1348, 0.0
      %v1375 = vmax.f32 %v1351, 0.0
      %v1376 = vmax.f32 %v1356, 0.0
      %v1377 = vmax.f32 %v1359, 0.0
      %v1378 = vpack.c.bf16 %v1363, %v1362
      %v1379 = vpack.c.bf16 %v1365, %v1364
      %v1380 = vpack.c.bf16 %v1367, %v1366
      %v1381 = vpack.c.bf16 %v1369, %v1368
      %v1382 = vpack.c.bf16 %v1371, %v1370
      %v1383 = vpack.c.bf16 %v1373, %v1372
      %v1384 = vpack.c.bf16 %v1375, %v1374
      %v1385 = vpack.c.bf16 %v1377, %v1376
      %v1386 = vld [vmem:[%s3] sm:$0xf]
      %v1387 = vld [vmem:[%s3 + $0x4] sm:$0xf]
      %v1388 = vld [vmem:[%s3 + $0x8] sm:$0xf]
      %v1389 = vld [vmem:[%s3 + $0xc] sm:$0xf]
      %v1390 = vld [vmem:[%s3 + $0x10] sm:$0xf]
      %v1391 = vld [vmem:[%s3 + $0x14] sm:$0xf]
      %v1392 = vld [vmem:[%s3 + $0x18] sm:$0xf]
      %v1393 = vld [vmem:[%s3 + $0x1c] sm:$0xf]
      %v1394 = vld [vmem:[%s3 + $0x20] sm:$0xf]
      %v1395 = vld [vmem:[%s3 + $0x24] sm:$0xf]
      %v1396 = vld [vmem:[%s3 + $0x28] sm:$0xf]
      %v1397 = vld [vmem:[%s3 + $0x2c] sm:$0xf]
      %v1398 = vld [vmem:[%s3 + $0x30] sm:$0xf]
      %v1399 = vld [vmem:[%s3 + $0x34] sm:$0xf]
      %v1400 = vld [vmem:[%s3 + $0x38] sm:$0xf]
      %v1401 = vld [vmem:[%s3 + $0x3c] sm:$0xf]
      %v1418 = vunpack.c.l.b16 %v1386
      %v1419 = vunpack.c.l.b16 %v1387
      %v1420 = vunpack.c.l.b16 %v1388
      %v1421 = vunpack.c.l.b16 %v1389
      %v1422 = vunpack.c.l.b16 %v1390
      %v1423 = vunpack.c.l.b16 %v1391
      %v1424 = vunpack.c.l.b16 %v1392
      %v1425 = vunpack.c.l.b16 %v1393
      %v1426 = vunpack.c.l.b16 %v1394
      %v1427 = vunpack.c.l.b16 %v1395
      %v1428 = vunpack.c.l.b16 %v1396
      %v1429 = vunpack.c.l.b16 %v1397
      %v1430 = vunpack.c.l.b16 %v1398
      %v1431 = vunpack.c.l.b16 %v1399
      %v1432 = vunpack.c.l.b16 %v1400
      %v1433 = vunpack.c.l.b16 %v1401
      %v1434 = vpack.c.b16 %v1419, %v1418
      %v1435 = vpack.c.b16 %v1421, %v1420
      %v1436 = vpack.c.b16 %v1423, %v1422
      %v1437 = vpack.c.b16 %v1425, %v1424
      %v1438 = vpack.c.b16 %v1427, %v1426
      %v1439 = vpack.c.b16 %v1429, %v1428
      %v1440 = vpack.c.b16 %v1431, %v1430
      %v1441 = vpack.c.b16 %v1433, %v1432
      %1450 = vmatprep.subr.bf16.mxu0 0
      %1451 = vmatpush1.bf16.msra.mxu0 %v1434
      %1452 = vmatprep.subr.bf16.mxu0 0
      %1453 = vmatpush1.bf16.msra.mxu0 %v1435
      %1454 = vmatprep.subr.bf16.mxu0 0
      %1455 = vmatpush1.bf16.msra.mxu0 %v1436
      %1456 = vmatprep.subr.bf16.mxu0 0
      %1457 = vmatpush1.bf16.msra.mxu0 %v1437
      %1458 = vmatprep.subr.bf16.mxu0 0
      %1459 = vmatpush1.bf16.msra.mxu0 %v1438
      %1460 = vmatprep.subr.bf16.mxu0 0
      %1461 = vmatpush1.bf16.msra.mxu0 %v1439
      %1462 = vmatprep.subr.bf16.mxu0 0
      %1463 = vmatpush1.bf16.msra.mxu0 %v1440
      %1464 = vmatprep.subr.bf16.mxu0 0
      %1465 = vmatpush1.bf16.msra.mxu0 %v1441
      %1466 = vmatprep.subr.bf16.mxu0 0
      %1467 = vmatpush1.bf16.msra.mxu0 0
      %1468 = vmatprep.subr.bf16.mxu0 0
      %1469 = vmatpush1.bf16.msra.mxu0 0
      %1470 = vmatprep.subr.bf16.mxu0 0
      %1471 = vmatpush1.bf16.msra.mxu0 0
      %1472 = vmatprep.subr.bf16.mxu0 0
      %1473 = vmatpush1.bf16.msra.mxu0 0
      %1474 = vmatprep.subr.bf16.mxu0 0
      %1475 = vmatpush1.bf16.msra.mxu0 0
      %1476 = vmatprep.subr.bf16.mxu0 0
      %1477 = vmatpush1.bf16.msra.mxu0 0
      %1478 = vmatprep.subr.bf16.mxu0 0
      %1479 = vmatpush1.bf16.msra.mxu0 0
      %1480 = vmatprep.subr.bf16.mxu0 0
      %1481 = vmatpush1.bf16.msra.mxu0 0
      %1482 = vmatprep.mubr.bf16.mxu0 0
      %1483 = vmatmul.mubr.bf16.gmra.mrb[0].mxu0 %v1378
      %v1484 = vpop.f32.mrb[0].mxu0
      %v1485 = vadd.f32 0.0, %v1484
      %v1486 = vpop.f32.mrb[0].mxu0
      %v1487 = vpop.f32.mrb[0].mxu0
      %v1488 = vadd.f32 0.0, %v1487
      %v1489 = vpop.f32.mrb[0].mxu0
      %1490 = vmatprep.mubr.bf16.mxu0 0
      %1491 = vmatmul.mubr.bf16.gmra.mrb[0].mxu0 %v1379
      %v1492 = vpop.f32.mrb[0].mxu0
      %v1493 = vadd.f32 0.0, %v1492
      %v1494 = vpop.f32.mrb[0].mxu0
      %v1495 = vpop.f32.mrb[0].mxu0
      %v1496 = vadd.f32 0.0, %v1495
      %v1497 = vpop.f32.mrb[0].mxu0
      %1498 = vmatprep.mubr.bf16.mxu0 0
      %1499 = vmatmul.mubr.bf16.gmra.mrb[0].mxu0 %v1380
      %v1500 = vpop.f32.mrb[0].mxu0
      %v1501 = vadd.f32 0.0, %v1500
      %v1502 = vpop.f32.mrb[0].mxu0
      %v1503 = vpop.f32.mrb[0].mxu0
      %v1504 = vadd.f32 0.0, %v1503
      %v1505 = vpop.f32.mrb[0].mxu0
      %1506 = vmatprep.mubr.bf16.mxu0 0
      %1507 = vmatmul.mubr.bf16.gmra.mrb[0].mxu0 %v1381
      %v1508 = vpop.f32.mrb[0].mxu0
      %v1509 = vadd.f32 0.0, %v1508
      %v1510 = vpop.f32.mrb[0].mxu0
      %v1511 = vpop.f32.mrb[0].mxu0
      %v1512 = vadd.f32 0.0, %v1511
      %v1513 = vpop.f32.mrb[0].mxu0
      %1514 = vmatprep.mubr.bf16.mxu0 0
      %1515 = vmatmul.mubr.bf16.gmra.mrb[0].mxu0 %v1382
      %v1516 = vpop.f32.mrb[0].mxu0
      %v1517 = vadd.f32 0.0, %v1516
      %v1518 = vpop.f32.mrb[0].mxu0
      %v1519 = vpop.f32.mrb[0].mxu0
      %v1520 = vadd.f32 0.0, %v1519
      %v1521 = vpop.f32.mrb[0].mxu0
      %1522 = vmatprep.mubr.bf16.mxu0 0
      %1523 = vmatmul.mubr.bf16.gmra.mrb[0].mxu0 %v1383
      %v1524 = vpop.f32.mrb[0].mxu0
      %v1525 = vadd.f32 0.0, %v1524
      %v1526 = vpop.f32.mrb[0].mxu0
      %v1527 = vpop.f32.mrb[0].mxu0
      %v1528 = vadd.f32 0.0, %v1527
      %v1529 = vpop.f32.mrb[0].mxu0
      %1530 = vmatprep.mubr.bf16.mxu0 0
      %1531 = vmatmul.mubr.bf16.gmra.mrb[0].mxu0 %v1384
      %v1532 = vpop.f32.mrb[0].mxu0
      %v1533 = vadd.f32 0.0, %v1532
      %v1534 = vpop.f32.mrb[0].mxu0
      %v1535 = vpop.f32.mrb[0].mxu0
      %v1536 = vadd.f32 0.0, %v1535
      %v1537 = vpop.f32.mrb[0].mxu0
      %1538 = vmatprep.mubr.bf16.mxu0 0
      %1539 = vmatmul.mubr.bf16.gmra.mrb[0].mxu0 %v1385
      %v1540 = vpop.f32.mrb[0].mxu0
      %v1541 = vadd.f32 0.0, %v1540
      %v1542 = vpop.f32.mrb[0].mxu0
      %v1543 = vpop.f32.mrb[0].mxu0
      %v1544 = vadd.f32 0.0, %v1543
      %v1545 = vpop.f32.mrb[0].mxu0
      %1546 = vdwg.mxu0
      %v1547 = vmax.f32 %v1485, 0.0
      %v1548 = vmax.f32 %v1488, 0.0
      %v1549 = vmax.f32 %v1493, 0.0
      %v1550 = vmax.f32 %v1496, 0.0
      %v1551 = vmax.f32 %v1501, 0.0
      %v1552 = vmax.f32 %v1504, 0.0
      %v1553 = vmax.f32 %v1509, 0.0
      %v1554 = vmax.f32 %v1512, 0.0
      %v1555 = vmax.f32 %v1517, 0.0
      %v1556 = vmax.f32 %v1520, 0.0
      %v1557 = vmax.f32 %v1525, 0.0
      %v1558 = vmax.f32 %v1528, 0.0
      %v1559 = vmax.f32 %v1533, 0.0
      %v1560 = vmax.f32 %v1536, 0.0
      %v1561 = vmax.f32 %v1541, 0.0
      %v1562 = vmax.f32 %v1544, 0.0
      %v1563 = vld [vmem:[%s4] sm:$0xf]
      %v1564 = vpack.c.bf16 %v1548, %v1547
      %v1565 = vpack.c.bf16 %v1550, %v1549
      %v1566 = vpack.c.bf16 %v1552, %v1551
      %v1567 = vpack.c.bf16 %v1554, %v1553
      %v1568 = vpack.c.bf16 %v1556, %v1555
      %v1569 = vpack.c.bf16 %v1558, %v1557
      %v1570 = vpack.c.bf16 %v1560, %v1559
      %v1571 = vpack.c.bf16 %v1562, %v1561
      %1572 = vmatprep.subr.bf16.mxu0 0
      %1573 = vmatpush1.bf16.xpose.msra.mxu0 %v1564
      %1574 = vmatprep.subr.bf16.mxu0 0
      %1575 = vmatpush1.bf16.xpose.msra.mxu0 %v1565
      %1576 = vmatprep.subr.bf16.mxu0 0
      %1577 = vmatpush1.bf16.xpose.msra.mxu0 %v1566
      %1578 = vmatprep.subr.bf16.mxu0 0
      %1579 = vmatpush1.bf16.xpose.msra.mxu0 %v1567
      %1580 = vmatprep.subr.bf16.mxu0 0
      %1581 = vmatpush1.bf16.xpose.msra.mxu0 %v1568
      %1582 = vmatprep.subr.bf16.mxu0 0
      %1583 = vmatpush1.bf16.xpose.msra.mxu0 %v1569
      %1584 = vmatprep.subr.bf16.mxu0 0
      %1585 = vmatpush1.bf16.xpose.msra.mxu0 %v1570
      %1586 = vmatprep.subr.bf16.mxu0 0
      %1587 = vmatpush1.bf16.xpose.msra.mxu0 %v1571
      %1588 = vmatprep.subr.bf16.mxu0 0
      %1589 = vmatpush1.bf16.xpose.msra.mxu0 0
      %1590 = vmatprep.subr.bf16.mxu0 0
      %1591 = vmatpush1.bf16.xpose.msra.mxu0 0
      %1592 = vmatprep.subr.bf16.mxu0 0
      %1593 = vmatpush1.bf16.xpose.msra.mxu0 0
      %1594 = vmatprep.subr.bf16.mxu0 0
      %1595 = vmatpush1.bf16.xpose.msra.mxu0 0
      %1596 = vmatprep.subr.bf16.mxu0 0
      %1597 = vmatpush1.bf16.xpose.msra.mxu0 0
      %1598 = vmatprep.subr.bf16.mxu0 0
      %1599 = vmatpush1.bf16.xpose.msra.mxu0 0
      %1600 = vmatprep.subr.bf16.mxu0 0
      %1601 = vmatpush1.bf16.xpose.msra.mxu0 0
      %1602 = vmatprep.subr.bf16.mxu0 0
      %1603 = vmatpush1.bf16.xpose.msra.mxu0 0
      %1604 = vmatprep.mubr.bf16.mxu0 0
      %1605 = vmatmul.mubr.bf16.gmra.mrb[0].mxu0 %v1563
      %v1606 = vpop.f32.mrb[0].mxu0
      %v1607 = vadd.f32 0.0, %v1606
      %v1608 = vpop.f32.mrb[0].mxu0
      %v1609 = vpop.f32.mrb[0].mxu0
      %v1610 = vpop.f32.mrb[0].mxu0
      %1611 = vdwg.mxu0
      %v1612 = vmax.f32 %v1607, 0.0
      %1613 = vst [vmem:[%s224] sm:$0xff] %v1612
      %p1614 = scmp.lt.s32.totalorder %s16, 1
      %s1615 = scalar_select %p1614, %s16, 1
      %s1616 = smul.addr %s1615, 8
      %s1617 = scalar_lea.vmem %s5, %s1616
      // Predicated region
      $region41: #{titanic_forward.1} parent=39 // pred_check
        %p1618 = pneg %p144
      $region42: #{titanic_forward.1} parent=39 // pred_check_branch
        %1620 = sbr.rel (%p1618) target = $region44
      $region43: #{titanic_forward.1} parent=39 // pred_region
        _
      $region44: #{titanic_forward.1} parent=39 // pred_fallthru
        _
    $region40: #{titanic_forward.1} parent=5 // pred_fallthru
      _
    %p1621 = scmp.le.s32.totalorder 2, %s11
    // Predicated region
    $region45: #{titanic_forward.1} parent=5 // pred_check
      %p1622 = pneg %p1621
    $region46: #{titanic_forward.1} parent=5 // pred_check_branch
      %1624 = sbr.rel (%p1622) target = $region48
    $region47: #{titanic_forward.1} parent=5 // pred_region
      %s1625 = ssub.s32 %s11, 2
      // Predicated region
      $region49: #{titanic_forward.1} parent=47 // pred_check
        %p1626 = pneg %p150
      $region50: #{titanic_forward.1} parent=47 // pred_check_branch
        %1628 = sbr.rel (%p1626) target = $region52
      $region51: #{titanic_forward.1} parent=47 // pred_region
        %p1629 = scmp.lt.s32.totalorder %s17, 1
        %s1630 = scalar_select %p1629, %s17, 1
        %s1631 = smul.addr %s1630, 8
        %s1632 = scalar_lea.vmem %s5, %s1631
      $region52: #{titanic_forward.1} parent=47 // pred_fallthru
        _
    $region48: #{titanic_forward.1} parent=5 // pred_fallthru
      _
  $region6: #{titanic_forward.1} parent=0 // loop_footer
    %s15 = sadd.s32 1, %s11
  $region7: #{titanic_forward.1} parent=0 // loop_footer_branch
    %10 = sbr.rel target = $region3
  $region8: #{titanic_forward.1} parent=0 // loop_exit
    _

</llo_original>
